<compile_context>
chip_gen: v6e
topology: v6e:2x2x1
jax: 0.10.0
libtpu: 0.0.40
codegen_flags: <defaults>
</compile_context>

<pallas_src>
import functools

import jax
import jax.numpy as jnp
from jax.experimental import pallas as pl
from jax.experimental.pallas import tpu as pltpu

KSIZE = 7
PAD = KSIZE // 2


def _spatial_attention_kernel(w_ref, x_ref, o_ref,
                              sum_ref, max_ref, avgp_ref, maxp_ref,
                              *, C, H, W, ragged, last_rows):
    # w_ref   : SMEM (2*7*7,) conv taps, layout [chan(avg,max), ky, kx]
    # x_ref   : VMEM (1, CT, S) lane-dense channel chunk of one image, S = H*W
    # o_ref   : VMEM (1, 1, H, W) output block (written on the last chunk)
    # sum_ref/max_ref  : VMEM (1, S) running channel sum / max accumulators
    # avgp_ref/maxp_ref: VMEM (Hp, Wp) zero-padded reduced maps for the conv
    c_idx = pl.program_id(1)
    n_chunks = pl.num_programs(1)

    @pl.when(c_idx == 0)
    def _init():
        sum_ref[...] = jnp.zeros_like(sum_ref)
        max_ref[...] = jnp.full_like(max_ref, -jnp.inf)

    xb = x_ref[0].astype(jnp.float32)                    # (CT, S), f32 reduce

    def _accumulate(masked):
        if masked:
            # Only the trailing ragged chunk pays the iota + selects.
            rows = jax.lax.broadcasted_iota(jnp.int32, xb.shape, 0)
            valid = rows < last_rows
            xs = jnp.where(valid, xb, 0.0)
            xm = jnp.where(valid, xb, -jnp.inf)
        else:
            xs = xm = xb
        sum_ref[...] = sum_ref[...] + jnp.sum(xs, axis=0, keepdims=True)
        max_ref[...] = jnp.maximum(max_ref[...],
                                   jnp.max(xm, axis=0, keepdims=True))

    if ragged:
        @pl.when(c_idx < n_chunks - 1)
        def _full_chunk():
            _accumulate(False)

        @pl.when(c_idx == n_chunks - 1)
        def _ragged_chunk():
            _accumulate(True)
    else:
        _accumulate(False)

    # ---- finalize: relayout tiny maps, zero-pad in VMEM, 7x7 conv, sigmoid ---
    @pl.when(c_idx == n_chunks - 1)
    def _finalize():
        avg_flat = sum_ref[...] * (1.0 / C)              # (1, S)
        max_flat = max_ref[...]                          # (1, S)

        avgp_ref[...] = jnp.zeros_like(avgp_ref)
        maxp_ref[...] = jnp.zeros_like(maxp_ref)
        # Relayout the tiny reduced maps once (static per-row copies): padding
        # never touches HBM, only these (Hp, Wp) scratch maps.
        for h in range(H):
            avgp_ref[PAD + h:PAD + h + 1, PAD:PAD + W] = \
                avg_flat[:, h * W:(h + 1) * W]
            maxp_ref[PAD + h:PAD + h + 1, PAD:PAD + W] = \
                max_flat[:, h * W:(h + 1) * W]

        avg_p = avgp_ref[...]                            # (Hp, Wp)
        max_p = maxp_ref[...]

        # Hoist all 98 SMEM tap reads out of the accumulate loops.
        w_avg = [[w_ref[0 * KSIZE * KSIZE + ky * KSIZE + kx]
                  for kx in range(KSIZE)] for ky in range(KSIZE)]
        w_max = [[w_ref[1 * KSIZE * KSIZE + ky * KSIZE + kx]
                  for kx in range(KSIZE)] for ky in range(KSIZE)]

        # Row-then-column: 7 lane-shifted copies per map (reused by all ky),
        # then only 7 sublane-offset slices total.
        ra = [avg_p[:, kx:kx + W] for kx in range(KSIZE)]   # (Hp, W) each
        rm = [max_p[:, kx:kx + W] for kx in range(KSIZE)]

        acc = jnp.zeros((H, W), jnp.float32)
        for ky in range(KSIZE):
            terms = [w_avg[ky][kx] * ra[kx] + w_max[ky][kx] * rm[kx]
                     for kx in range(KSIZE)]
            # Tree-sum: short dependency chain across the 4 VALUs.
            row = ((terms[0] + terms[1]) + (terms[2] + terms[3])) \
                + ((terms[4] + terms[5]) + terms[6])
            acc = acc + row[ky:ky + H, :]

        o_ref[0, 0] = jax.nn.sigmoid(acc).astype(o_ref.dtype)


def spatial_attention(x, conv_weight, *,
                      block_vmem_bytes=8 * 1024 * 1024,
                      vmem_limit_bytes=48 * 1024 * 1024):
    """x: (N, C, H, W); conv_weight: (1, 2, 7, 7) -> (N, 1, H, W)."""
    N, C, H, W = x.shape
    assert conv_weight.shape == (1, 2, KSIZE, KSIZE)
    S = H * W
    Hp, Wp = H + 2 * PAD, W + 2 * PAD
    itemsize = jnp.dtype(x.dtype).itemsize

    # Padded VMEM footprint of one (1, ct, S) input block: ct sublane rows
    # (kept a multiple of 8) x S lanes padded up to a multiple of 128 -- the
    # REAL (8,128)-tiled bytes, not the nominal ones.
    s_pad = -(-S // 128) * 128
    row_bytes = s_pad * itemsize
    max_ct = max(1, block_vmem_bytes // row_bytes)
    if C <= max_ct:
        ct = C                                   # single chunk; block == full dim
    else:
        ct = max(8, (max_ct // 8) * 8)           # multiple of 8 sublanes
    n_chunks = pl.cdiv(C, ct)
    ragged = (C % ct) != 0
    last_rows = C - (n_chunks - 1) * ct          # valid rows in the last chunk

    x_flat = x.reshape(N, C, S)                  # free view; lane-dense last dim
    w_flat = conv_weight.reshape(-1).astype(jnp.float32)   # [chan, ky, kx]

    kernel = functools.partial(_spatial_attention_kernel,
                               C=C, H=H, W=W,
                               ragged=ragged, last_rows=last_rows)

    cost = pl.CostEstimate(
        flops=N * S * (2 * C + 4 * KSIZE * KSIZE),
        transcendentals=N * S,
        bytes_accessed=N * C * S * itemsize + N * S * itemsize + w_flat.size * 4,
    )

    return pl.pallas_call(
        kernel,
        out_shape=jax.ShapeDtypeStruct((N, 1, H, W), x.dtype),
        grid_spec=pltpu.PrefetchScalarGridSpec(
            num_scalar_prefetch=0,
            grid=(N, n_chunks),
            in_specs=[
                pl.BlockSpec(memory_space=pltpu.SMEM),               # conv taps
                pl.BlockSpec((1, ct, S), lambda n, c: (n, c, 0)),    # x, lane-dense
            ],
            out_specs=pl.BlockSpec((1, 1, H, W), lambda n, c: (n, 0, 0, 0)),
            scratch_shapes=[
                pltpu.VMEM((1, S), jnp.float32),     # running channel sum
                pltpu.VMEM((1, S), jnp.float32),     # running channel max
                pltpu.VMEM((Hp, Wp), jnp.float32),   # zero-padded avg map
                pltpu.VMEM((Hp, Wp), jnp.float32),   # zero-padded max map
            ],
        ),
        compiler_params=pltpu.CompilerParams(
            dimension_semantics=("parallel", "arbitrary"),
            vmem_limit_bytes=vmem_limit_bytes,
        ),
        cost_estimate=cost,
    )(w_flat, x_flat)


def _reference(x, conv_weight):
    """Pure-JAX reference matching the PyTorch forward exactly."""
    avg = jnp.mean(x, axis=1, keepdims=True)
    mx = jnp.max(x, axis=1, keepdims=True)
    cat = jnp.concatenate([avg, mx], axis=1)                # (N,2,H,W)
    out = jax.lax.conv_general_dilated(
        cat, conv_weight,
        window_strides=(1, 1),
        padding=((PAD, PAD), (PAD, PAD)),
        dimension_numbers=("NCHW", "OIHW", "NCHW"),
    )
    return jax.nn.sigmoid(out)


if __name__ == "__main__":
    key = jax.random.PRNGKey(0)
    kx, kw = jax.random.split(key)

    # Small shapes consistent with the module's forward.
    N, C, H, W = 2, 4, 16, 16
    x = jax.random.normal(kx, (N, C, H, W), dtype=jnp.float32)

    # Deterministic synthetic conv weight, shape (out=1, in=2, 7, 7), no bias.
    fan_in = 2 * KSIZE * KSIZE
    conv_weight = jax.random.normal(kw, (1, 2, KSIZE, KSIZE), dtype=jnp.float32)
    conv_weight = conv_weight * (2.0 / fan_in) ** 0.5

    out = spatial_attention(x, conv_weight)
    out = jax.block_until_ready(out)

    ref = _reference(x, conv_weight)
    assert out.shape == (N, 1, H, W)
    assert jnp.allclose(out, ref, atol=1e-5, rtol=1e-5), "mismatch vs reference"

    print("KERNEL_OK")
</pallas_src>

<mosaic_0001>
module attributes {stable_mosaic.version = 11 : i64} {
  func.func @_spatial_attention_kernel(%arg0: i32, %arg1: i32, %arg2: memref<98xf32, #tpu.memory_space<smem>>, %arg3: memref<1x4x256xf32, #tpu.memory_space<vmem>>, %arg4: memref<1x1x16x16xf32, #tpu.memory_space<vmem>>, %arg5: memref<1x256xf32, #tpu.memory_space<vmem>>, %arg6: memref<1x256xf32, #tpu.memory_space<vmem>>, %arg7: memref<22x22xf32, #tpu.memory_space<vmem>>, %arg8: memref<22x22xf32, #tpu.memory_space<vmem>>) attributes {dimension_semantics = [#tpu.dimension_semantics<parallel>, #tpu.dimension_semantics<arbitrary>], iteration_bounds = array<i64: 2, 1>, scalar_prefetch = 0 : i64, scratch_operands = 4 : i64, tpu.core_type = #tpu.core_type<tc>, window_params = [{transform_indices = @transform_0, window_bounds = array<i64: 98>}, {transform_indices = @transform_1, window_bounds = array<i64: 1, 4, 256>}, {transform_indices = @transform_2, window_bounds = array<i64: 1, 1, 16, 16>}]} {
    %c0_i32 = arith.constant 0 : i32
    %0 = arith.cmpi eq, %arg1, %c0_i32 : i32
    %1 = arith.extui %0 : i1 to i32
    %c0_i32_0 = arith.constant 0 : i32
    %2 = arith.cmpi ne, %1, %c0_i32_0 : i32
    scf.if %2 {
      %cst_14 = arith.constant 0.000000e+00 : f32
      %18 = vector.broadcast %cst_14 : f32 to vector<1x256xf32>
      %c0_15 = arith.constant 0 : index
      %c0_16 = arith.constant 0 : index
      %19 = vector.load %arg5[%c0_15, %c0_16] : memref<1x256xf32, #tpu.memory_space<vmem>>, vector<1x256xf32>
      tpu.vector_store %arg5[%c0_15, %c0_16], %18 {strides = array<i32>} : memref<1x256xf32, #tpu.memory_space<vmem>>, vector<1x256xf32>,
      %cst_17 = arith.constant 0xFF800000 : f32
      %20 = vector.broadcast %cst_17 : f32 to vector<1x256xf32>
      %c0_18 = arith.constant 0 : index
      %c0_19 = arith.constant 0 : index
      %21 = vector.load %arg6[%c0_18, %c0_19] : memref<1x256xf32, #tpu.memory_space<vmem>>, vector<1x256xf32>
      tpu.vector_store %arg6[%c0_18, %c0_19], %20 {strides = array<i32>} : memref<1x256xf32, #tpu.memory_space<vmem>>, vector<1x256xf32>,
    } else {
    }
    %c0 = arith.constant 0 : index
    %c0_1 = arith.constant 0 : index
    %c0_2 = arith.constant 0 : index
    %3 = vector.load %arg3[%c0, %c0_1, %c0_2] : memref<1x4x256xf32, #tpu.memory_space<vmem>>, vector<1x4x256xf32>
    %4 = vector.shape_cast %3 : vector<1x4x256xf32> to vector<4x256xf32>
    %c0_3 = arith.constant 0 : index
    %c0_4 = arith.constant 0 : index
    %5 = vector.load %arg5[%c0_3, %c0_4] : memref<1x256xf32, #tpu.memory_space<vmem>>, vector<1x256xf32>
    %cst = arith.constant dense<0.000000e+00> : vector<256xf32>
    %6 = vector.multi_reduction <add>, %4, %cst [0] : vector<4x256xf32> to vector<256xf32>
    %7 = vector.shape_cast %6 : vector<256xf32> to vector<1x256xf32>
    %8 = arith.addf %5, %7 : vector<1x256xf32>
    %c0_5 = arith.constant 0 : index
    %c0_6 = arith.constant 0 : index
    %9 = vector.load %arg5[%c0_5, %c0_6] : memref<1x256xf32, #tpu.memory_space<vmem>>, vector<1x256xf32>
    tpu.vector_store %arg5[%c0_5, %c0_6], %8 {strides = array<i32>} : memref<1x256xf32, #tpu.memory_space<vmem>>, vector<1x256xf32>,
    %c0_7 = arith.constant 0 : index
    %c0_8 = arith.constant 0 : index
    %10 = vector.load %arg6[%c0_7, %c0_8] : memref<1x256xf32, #tpu.memory_space<vmem>>, vector<1x256xf32>
    %cst_9 = arith.constant dense<0xFF800000> : vector<256xf32>
    %11 = vector.multi_reduction <maximumf>, %4, %cst_9 [0] : vector<4x256xf32> to vector<256xf32>
    %12 = vector.shape_cast %11 : vector<256xf32> to vector<1x256xf32>
    %13 = arith.maximumf %10, %12 : vector<1x256xf32>
    %c0_10 = arith.constant 0 : index
    %c0_11 = arith.constant 0 : index
    %14 = vector.load %arg6[%c0_10, %c0_11] : memref<1x256xf32, #tpu.memory_space<vmem>>, vector<1x256xf32>
    tpu.vector_store %arg6[%c0_10, %c0_11], %13 {strides = array<i32>} : memref<1x256xf32, #tpu.memory_space<vmem>>, vector<1x256xf32>,
    %c0_i32_12 = arith.constant 0 : i32
    %15 = arith.cmpi eq, %arg1, %c0_i32_12 : i32
    %16 = arith.extui %15 : i1 to i32
    %c0_i32_13 = arith.constant 0 : i32
    %17 = arith.cmpi ne, %16, %c0_i32_13 : i32
    scf.if %17 {
      %c0_14 = arith.constant 0 : index
      %c0_15 = arith.constant 0 : index
      %18 = vector.load %arg5[%c0_14, %c0_15] : memref<1x256xf32, #tpu.memory_space<vmem>>, vector<1x256xf32>
      %cst_16 = arith.constant 2.500000e-01 : f32
      %19 = vector.broadcast %cst_16 : f32 to vector<1x256xf32>
      %20 = arith.mulf %18, %19 : vector<1x256xf32>
      %c0_17 = arith.constant 0 : index
      %c0_18 = arith.constant 0 : index
      %21 = vector.load %arg6[%c0_17, %c0_18] : memref<1x256xf32, #tpu.memory_space<vmem>>, vector<1x256xf32>
      %cst_19 = arith.constant 0.000000e+00 : f32
      %22 = vector.broadcast %cst_19 : f32 to vector<22x22xf32>
      %c0_20 = arith.constant 0 : index
      %c0_21 = arith.constant 0 : index
      %23 = vector.load %arg7[%c0_20, %c0_21] : memref<22x22xf32, #tpu.memory_space<vmem>>, vector<22x22xf32>
      tpu.vector_store %arg7[%c0_20, %c0_21], %22 {strides = array<i32>} : memref<22x22xf32, #tpu.memory_space<vmem>>, vector<22x22xf32>,
      %cst_22 = arith.constant 0.000000e+00 : f32
      %24 = vector.broadcast %cst_22 : f32 to vector<22x22xf32>
      %c0_23 = arith.constant 0 : index
      %c0_24 = arith.constant 0 : index
      %25 = vector.load %arg8[%c0_23, %c0_24] : memref<22x22xf32, #tpu.memory_space<vmem>>, vector<22x22xf32>
      tpu.vector_store %arg8[%c0_23, %c0_24], %24 {strides = array<i32>} : memref<22x22xf32, #tpu.memory_space<vmem>>, vector<22x22xf32>,
      %26 = vector.extract_strided_slice %20 {offsets = [0, 0], sizes = [1, 16], strides = [1, 1]} : vector<1x256xf32> to vector<1x16xf32>
      %c3 = arith.constant 3 : index
      %c3_25 = arith.constant 3 : index
      %27 = vector.load %arg7[%c3, %c3_25] : memref<22x22xf32, #tpu.memory_space<vmem>>, vector<1x16xf32>
      tpu.vector_store %arg7[%c3, %c3_25], %26 {strides = array<i32>} : memref<22x22xf32, #tpu.memory_space<vmem>>, vector<1x16xf32>,
      %28 = vector.extract_strided_slice %21 {offsets = [0, 0], sizes = [1, 16], strides = [1, 1]} : vector<1x256xf32> to vector<1x16xf32>
      %c3_26 = arith.constant 3 : index
      %c3_27 = arith.constant 3 : index
      %29 = vector.load %arg8[%c3_26, %c3_27] : memref<22x22xf32, #tpu.memory_space<vmem>>, vector<1x16xf32>
      tpu.vector_store %arg8[%c3_26, %c3_27], %28 {strides = array<i32>} : memref<22x22xf32, #tpu.memory_space<vmem>>, vector<1x16xf32>,
      %30 = vector.extract_strided_slice %20 {offsets = [0, 16], sizes = [1, 16], strides = [1, 1]} : vector<1x256xf32> to vector<1x16xf32>
      %c4 = arith.constant 4 : index
      %c3_28 = arith.constant 3 : index
      %31 = vector.load %arg7[%c4, %c3_28] : memref<22x22xf32, #tpu.memory_space<vmem>>, vector<1x16xf32>
      tpu.vector_store %arg7[%c4, %c3_28], %30 {strides = array<i32>} : memref<22x22xf32, #tpu.memory_space<vmem>>, vector<1x16xf32>,
      %32 = vector.extract_strided_slice %21 {offsets = [0, 16], sizes = [1, 16], strides = [1, 1]} : vector<1x256xf32> to vector<1x16xf32>
      %c4_29 = arith.constant 4 : index
      %c3_30 = arith.constant 3 : index
      %33 = vector.load %arg8[%c4_29, %c3_30] : memref<22x22xf32, #tpu.memory_space<vmem>>, vector<1x16xf32>
      tpu.vector_store %arg8[%c4_29, %c3_30], %32 {strides = array<i32>} : memref<22x22xf32, #tpu.memory_space<vmem>>, vector<1x16xf32>,
      %34 = vector.extract_strided_slice %20 {offsets = [0, 32], sizes = [1, 16], strides = [1, 1]} : vector<1x256xf32> to vector<1x16xf32>
      %c5 = arith.constant 5 : index
      %c3_31 = arith.constant 3 : index
      %35 = vector.load %arg7[%c5, %c3_31] : memref<22x22xf32, #tpu.memory_space<vmem>>, vector<1x16xf32>
      tpu.vector_store %arg7[%c5, %c3_31], %34 {strides = array<i32>} : memref<22x22xf32, #tpu.memory_space<vmem>>, vector<1x16xf32>,
      %36 = vector.extract_strided_slice %21 {offsets = [0, 32], sizes = [1, 16], strides = [1, 1]} : vector<1x256xf32> to vector<1x16xf32>
      %c5_32 = arith.constant 5 : index
      %c3_33 = arith.constant 3 : index
      %37 = vector.load %arg8[%c5_32, %c3_33] : memref<22x22xf32, #tpu.memory_space<vmem>>, vector<1x16xf32>
      tpu.vector_store %arg8[%c5_32, %c3_33], %36 {strides = array<i32>} : memref<22x22xf32, #tpu.memory_space<vmem>>, vector<1x16xf32>,
      %38 = vector.extract_strided_slice %20 {offsets = [0, 48], sizes = [1, 16], strides = [1, 1]} : vector<1x256xf32> to vector<1x16xf32>
      %c6 = arith.constant 6 : index
      %c3_34 = arith.constant 3 : index
      %39 = vector.load %arg7[%c6, %c3_34] : memref<22x22xf32, #tpu.memory_space<vmem>>, vector<1x16xf32>
      tpu.vector_store %arg7[%c6, %c3_34], %38 {strides = array<i32>} : memref<22x22xf32, #tpu.memory_space<vmem>>, vector<1x16xf32>,
      %40 = vector.extract_strided_slice %21 {offsets = [0, 48], sizes = [1, 16], strides = [1, 1]} : vector<1x256xf32> to vector<1x16xf32>
      %c6_35 = arith.constant 6 : index
      %c3_36 = arith.constant 3 : index
      %41 = vector.load %arg8[%c6_35, %c3_36] : memref<22x22xf32, #tpu.memory_space<vmem>>, vector<1x16xf32>
      tpu.vector_store %arg8[%c6_35, %c3_36], %40 {strides = array<i32>} : memref<22x22xf32, #tpu.memory_space<vmem>>, vector<1x16xf32>,
      %42 = vector.extract_strided_slice %20 {offsets = [0, 64], sizes = [1, 16], strides = [1, 1]} : vector<1x256xf32> to vector<1x16xf32>
      %c7 = arith.constant 7 : index
      %c3_37 = arith.constant 3 : index
      %43 = vector.load %arg7[%c7, %c3_37] : memref<22x22xf32, #tpu.memory_space<vmem>>, vector<1x16xf32>
      tpu.vector_store %arg7[%c7, %c3_37], %42 {strides = array<i32>} : memref<22x22xf32, #tpu.memory_space<vmem>>, vector<1x16xf32>,
      %44 = vector.extract_strided_slice %21 {offsets = [0, 64], sizes = [1, 16], strides = [1, 1]} : vector<1x256xf32> to vector<1x16xf32>
      %c7_38 = arith.constant 7 : index
      %c3_39 = arith.constant 3 : index
      %45 = vector.load %arg8[%c7_38, %c3_39] : memref<22x22xf32, #tpu.memory_space<vmem>>, vector<1x16xf32>
      tpu.vector_store %arg8[%c7_38, %c3_39], %44 {strides = array<i32>} : memref<22x22xf32, #tpu.memory_space<vmem>>, vector<1x16xf32>,
      %46 = vector.extract_strided_slice %20 {offsets = [0, 80], sizes = [1, 16], strides = [1, 1]} : vector<1x256xf32> to vector<1x16xf32>
      %c8 = arith.constant 8 : index
      %c3_40 = arith.constant 3 : index
      %47 = vector.load %arg7[%c8, %c3_40] : memref<22x22xf32, #tpu.memory_space<vmem>>, vector<1x16xf32>
      tpu.vector_store %arg7[%c8, %c3_40], %46 {strides = array<i32>} : memref<22x22xf32, #tpu.memory_space<vmem>>, vector<1x16xf32>,
      %48 = vector.extract_strided_slice %21 {offsets = [0, 80], sizes = [1, 16], strides = [1, 1]} : vector<1x256xf32> to vector<1x16xf32>
      %c8_41 = arith.constant 8 : index
      %c3_42 = arith.constant 3 : index
      %49 = vector.load %arg8[%c8_41, %c3_42] : memref<22x22xf32, #tpu.memory_space<vmem>>, vector<1x16xf32>
      tpu.vector_store %arg8[%c8_41, %c3_42], %48 {strides = array<i32>} : memref<22x22xf32, #tpu.memory_space<vmem>>, vector<1x16xf32>,
      %50 = vector.extract_strided_slice %20 {offsets = [0, 96], sizes = [1, 16], strides = [1, 1]} : vector<1x256xf32> to vector<1x16xf32>
      %c9 = arith.constant 9 : index
      %c3_43 = arith.constant 3 : index
      %51 = vector.load %arg7[%c9, %c3_43] : memref<22x22xf32, #tpu.memory_space<vmem>>, vector<1x16xf32>
      tpu.vector_store %arg7[%c9, %c3_43], %50 {strides = array<i32>} : memref<22x22xf32, #tpu.memory_space<vmem>>, vector<1x16xf32>,
      %52 = vector.extract_strided_slice %21 {offsets = [0, 96], sizes = [1, 16], strides = [1, 1]} : vector<1x256xf32> to vector<1x16xf32>
      %c9_44 = arith.constant 9 : index
      %c3_45 = arith.constant 3 : index
      %53 = vector.load %arg8[%c9_44, %c3_45] : memref<22x22xf32, #tpu.memory_space<vmem>>, vector<1x16xf32>
      tpu.vector_store %arg8[%c9_44, %c3_45], %52 {strides = array<i32>} : memref<22x22xf32, #tpu.memory_space<vmem>>, vector<1x16xf32>,
      %54 = vector.extract_strided_slice %20 {offsets = [0, 112], sizes = [1, 16], strides = [1, 1]} : vector<1x256xf32> to vector<1x16xf32>
      %c10 = arith.constant 10 : index
      %c3_46 = arith.constant 3 : index
      %55 = vector.load %arg7[%c10, %c3_46] : memref<22x22xf32, #tpu.memory_space<vmem>>, vector<1x16xf32>
      tpu.vector_store %arg7[%c10, %c3_46], %54 {strides = array<i32>} : memref<22x22xf32, #tpu.memory_space<vmem>>, vector<1x16xf32>,
      %56 = vector.extract_strided_slice %21 {offsets = [0, 112], sizes = [1, 16], strides = [1, 1]} : vector<1x256xf32> to vector<1x16xf32>
      %c10_47 = arith.constant 10 : index
      %c3_48 = arith.constant 3 : index
      %57 = vector.load %arg8[%c10_47, %c3_48] : memref<22x22xf32, #tpu.memory_space<vmem>>, vector<1x16xf32>
      tpu.vector_store %arg8[%c10_47, %c3_48], %56 {strides = array<i32>} : memref<22x22xf32, #tpu.memory_space<vmem>>, vector<1x16xf32>,
      %58 = vector.extract_strided_slice %20 {offsets = [0, 128], sizes = [1, 16], strides = [1, 1]} : vector<1x256xf32> to vector<1x16xf32>
      %c11 = arith.constant 11 : index
      %c3_49 = arith.constant 3 : index
      %59 = vector.load %arg7[%c11, %c3_49] : memref<22x22xf32, #tpu.memory_space<vmem>>, vector<1x16xf32>
      tpu.vector_store %arg7[%c11, %c3_49], %58 {strides = array<i32>} : memref<22x22xf32, #tpu.memory_space<vmem>>, vector<1x16xf32>,
      %60 = vector.extract_strided_slice %21 {offsets = [0, 128], sizes = [1, 16], strides = [1, 1]} : vector<1x256xf32> to vector<1x16xf32>
      %c11_50 = arith.constant 11 : index
      %c3_51 = arith.constant 3 : index
      %61 = vector.load %arg8[%c11_50, %c3_51] : memref<22x22xf32, #tpu.memory_space<vmem>>, vector<1x16xf32>
      tpu.vector_store %arg8[%c11_50, %c3_51], %60 {strides = array<i32>} : memref<22x22xf32, #tpu.memory_space<vmem>>, vector<1x16xf32>,
      %62 = vector.extract_strided_slice %20 {offsets = [0, 144], sizes = [1, 16], strides = [1, 1]} : vector<1x256xf32> to vector<1x16xf32>
      %c12 = arith.constant 12 : index
      %c3_52 = arith.constant 3 : index
      %63 = vector.load %arg7[%c12, %c3_52] : memref<22x22xf32, #tpu.memory_space<vmem>>, vector<1x16xf32>
      tpu.vector_store %arg7[%c12, %c3_52], %62 {strides = array<i32>} : memref<22x22xf32, #tpu.memory_space<vmem>>, vector<1x16xf32>,
      %64 = vector.extract_strided_slice %21 {offsets = [0, 144], sizes = [1, 16], strides = [1, 1]} : vector<1x256xf32> to vector<1x16xf32>
      %c12_53 = arith.constant 12 : index
      %c3_54 = arith.constant 3 : index
      %65 = vector.load %arg8[%c12_53, %c3_54] : memref<22x22xf32, #tpu.memory_space<vmem>>, vector<1x16xf32>
      tpu.vector_store %arg8[%c12_53, %c3_54], %64 {strides = array<i32>} : memref<22x22xf32, #tpu.memory_space<vmem>>, vector<1x16xf32>,
      %66 = vector.extract_strided_slice %20 {offsets = [0, 160], sizes = [1, 16], strides = [1, 1]} : vector<1x256xf32> to vector<1x16xf32>
      %c13 = arith.constant 13 : index
      %c3_55 = arith.constant 3 : index
      %67 = vector.load %arg7[%c13, %c3_55] : memref<22x22xf32, #tpu.memory_space<vmem>>, vector<1x16xf32>
      tpu.vector_store %arg7[%c13, %c3_55], %66 {strides = array<i32>} : memref<22x22xf32, #tpu.memory_space<vmem>>, vector<1x16xf32>,
      %68 = vector.extract_strided_slice %21 {offsets = [0, 160], sizes = [1, 16], strides = [1, 1]} : vector<1x256xf32> to vector<1x16xf32>
      %c13_56 = arith.constant 13 : index
      %c3_57 = arith.constant 3 : index
      %69 = vector.load %arg8[%c13_56, %c3_57] : memref<22x22xf32, #tpu.memory_space<vmem>>, vector<1x16xf32>
      tpu.vector_store %arg8[%c13_56, %c3_57], %68 {strides = array<i32>} : memref<22x22xf32, #tpu.memory_space<vmem>>, vector<1x16xf32>,
      %70 = vector.extract_strided_slice %20 {offsets = [0, 176], sizes = [1, 16], strides = [1, 1]} : vector<1x256xf32> to vector<1x16xf32>
      %c14 = arith.constant 14 : index
      %c3_58 = arith.constant 3 : index
      %71 = vector.load %arg7[%c14, %c3_58] : memref<22x22xf32, #tpu.memory_space<vmem>>, vector<1x16xf32>
      tpu.vector_store %arg7[%c14, %c3_58], %70 {strides = array<i32>} : memref<22x22xf32, #tpu.memory_space<vmem>>, vector<1x16xf32>,
      %72 = vector.extract_strided_slice %21 {offsets = [0, 176], sizes = [1, 16], strides = [1, 1]} : vector<1x256xf32> to vector<1x16xf32>
      %c14_59 = arith.constant 14 : index
      %c3_60 = arith.constant 3 : index
      %73 = vector.load %arg8[%c14_59, %c3_60] : memref<22x22xf32, #tpu.memory_space<vmem>>, vector<1x16xf32>
      tpu.vector_store %arg8[%c14_59, %c3_60], %72 {strides = array<i32>} : memref<22x22xf32, #tpu.memory_space<vmem>>, vector<1x16xf32>,
      %74 = vector.extract_strided_slice %20 {offsets = [0, 192], sizes = [1, 16], strides = [1, 1]} : vector<1x256xf32> to vector<1x16xf32>
      %c15 = arith.constant 15 : index
      %c3_61 = arith.constant 3 : index
      %75 = vector.load %arg7[%c15, %c3_61] : memref<22x22xf32, #tpu.memory_space<vmem>>, vector<1x16xf32>
      tpu.vector_store %arg7[%c15, %c3_61], %74 {strides = array<i32>} : memref<22x22xf32, #tpu.memory_space<vmem>>, vector<1x16xf32>,
      %76 = vector.extract_strided_slice %21 {offsets = [0, 192], sizes = [1, 16], strides = [1, 1]} : vector<1x256xf32> to vector<1x16xf32>
      %c15_62 = arith.constant 15 : index
      %c3_63 = arith.constant 3 : index
      %77 = vector.load %arg8[%c15_62, %c3_63] : memref<22x22xf32, #tpu.memory_space<vmem>>, vector<1x16xf32>
      tpu.vector_store %arg8[%c15_62, %c3_63], %76 {strides = array<i32>} : memref<22x22xf32, #tpu.memory_space<vmem>>, vector<1x16xf32>,
      %78 = vector.extract_strided_slice %20 {offsets = [0, 208], sizes = [1, 16], strides = [1, 1]} : vector<1x256xf32> to vector<1x16xf32>
      %c16 = arith.constant 16 : index
      %c3_64 = arith.constant 3 : index
      %79 = vector.load %arg7[%c16, %c3_64] : memref<22x22xf32, #tpu.memory_space<vmem>>, vector<1x16xf32>
      tpu.vector_store %arg7[%c16, %c3_64], %78 {strides = array<i32>} : memref<22x22xf32, #tpu.memory_space<vmem>>, vector<1x16xf32>,
      %80 = vector.extract_strided_slice %21 {offsets = [0, 208], sizes = [1, 16], strides = [1, 1]} : vector<1x256xf32> to vector<1x16xf32>
      %c16_65 = arith.constant 16 : index
      %c3_66 = arith.constant 3 : index
      %81 = vector.load %arg8[%c16_65, %c3_66] : memref<22x22xf32, #tpu.memory_space<vmem>>, vector<1x16xf32>
      tpu.vector_store %arg8[%c16_65, %c3_66], %80 {strides = array<i32>} : memref<22x22xf32, #tpu.memory_space<vmem>>, vector<1x16xf32>,
      %82 = vector.extract_strided_slice %20 {offsets = [0, 224], sizes = [1, 16], strides = [1, 1]} : vector<1x256xf32> to vector<1x16xf32>
      %c17 = arith.constant 17 : index
      %c3_67 = arith.constant 3 : index
      %83 = vector.load %arg7[%c17, %c3_67] : memref<22x22xf32, #tpu.memory_space<vmem>>, vector<1x16xf32>
      tpu.vector_store %arg7[%c17, %c3_67], %82 {strides = array<i32>} : memref<22x22xf32, #tpu.memory_space<vmem>>, vector<1x16xf32>,
      %84 = vector.extract_strided_slice %21 {offsets = [0, 224], sizes = [1, 16], strides = [1, 1]} : vector<1x256xf32> to vector<1x16xf32>
      %c17_68 = arith.constant 17 : index
      %c3_69 = arith.constant 3 : index
      %85 = vector.load %arg8[%c17_68, %c3_69] : memref<22x22xf32, #tpu.memory_space<vmem>>, vector<1x16xf32>
      tpu.vector_store %arg8[%c17_68, %c3_69], %84 {strides = array<i32>} : memref<22x22xf32, #tpu.memory_space<vmem>>, vector<1x16xf32>,
      %86 = vector.extract_strided_slice %20 {offsets = [0, 240], sizes = [1, 16], strides = [1, 1]} : vector<1x256xf32> to vector<1x16xf32>
      %c18 = arith.constant 18 : index
      %c3_70 = arith.constant 3 : index
      %87 = vector.load %arg7[%c18, %c3_70] : memref<22x22xf32, #tpu.memory_space<vmem>>, vector<1x16xf32>
      tpu.vector_store %arg7[%c18, %c3_70], %86 {strides = array<i32>} : memref<22x22xf32, #tpu.memory_space<vmem>>, vector<1x16xf32>,
      %88 = vector.extract_strided_slice %21 {offsets = [0, 240], sizes = [1, 16], strides = [1, 1]} : vector<1x256xf32> to vector<1x16xf32>
      %c18_71 = arith.constant 18 : index
      %c3_72 = arith.constant 3 : index
      %89 = vector.load %arg8[%c18_71, %c3_72] : memref<22x22xf32, #tpu.memory_space<vmem>>, vector<1x16xf32>
      tpu.vector_store %arg8[%c18_71, %c3_72], %88 {strides = array<i32>} : memref<22x22xf32, #tpu.memory_space<vmem>>, vector<1x16xf32>,
      %c0_73 = arith.constant 0 : index
      %c0_74 = arith.constant 0 : index
      %90 = vector.load %arg7[%c0_73, %c0_74] : memref<22x22xf32, #tpu.memory_space<vmem>>, vector<22x22xf32>
      %c0_75 = arith.constant 0 : index
      %c0_76 = arith.constant 0 : index
      %91 = vector.load %arg8[%c0_75, %c0_76] : memref<22x22xf32, #tpu.memory_space<vmem>>, vector<22x22xf32>
      %c0_77 = arith.constant 0 : index
      %92 = memref.load %arg2[%c0_77] : memref<98xf32, #tpu.memory_space<smem>>
      %c1 = arith.constant 1 : index
      %93 = memref.load %arg2[%c1] : memref<98xf32, #tpu.memory_space<smem>>
      %c2 = arith.constant 2 : index
      %94 = memref.load %arg2[%c2] : memref<98xf32, #tpu.memory_space<smem>>
      %c3_78 = arith.constant 3 : index
      %95 = memref.load %arg2[%c3_78] : memref<98xf32, #tpu.memory_space<smem>>
      %c4_79 = arith.constant 4 : index
      %96 = memref.load %arg2[%c4_79] : memref<98xf32, #tpu.memory_space<smem>>
      %c5_80 = arith.constant 5 : index
      %97 = memref.load %arg2[%c5_80] : memref<98xf32, #tpu.memory_space<smem>>
      %c6_81 = arith.constant 6 : index
      %98 = memref.load %arg2[%c6_81] : memref<98xf32, #tpu.memory_space<smem>>
      %c7_82 = arith.constant 7 : index
      %99 = memref.load %arg2[%c7_82] : memref<98xf32, #tpu.memory_space<smem>>
      %c8_83 = arith.constant 8 : index
      %100 = memref.load %arg2[%c8_83] : memref<98xf32, #tpu.memory_space<smem>>
      %c9_84 = arith.constant 9 : index
      %101 = memref.load %arg2[%c9_84] : memref<98xf32, #tpu.memory_space<smem>>
      %c10_85 = arith.constant 10 : index
      %102 = memref.load %arg2[%c10_85] : memref<98xf32, #tpu.memory_space<smem>>
      %c11_86 = arith.constant 11 : index
      %103 = memref.load %arg2[%c11_86] : memref<98xf32, #tpu.memory_space<smem>>
      %c12_87 = arith.constant 12 : index
      %104 = memref.load %arg2[%c12_87] : memref<98xf32, #tpu.memory_space<smem>>
      %c13_88 = arith.constant 13 : index
      %105 = memref.load %arg2[%c13_88] : memref<98xf32, #tpu.memory_space<smem>>
      %c14_89 = arith.constant 14 : index
      %106 = memref.load %arg2[%c14_89] : memref<98xf32, #tpu.memory_space<smem>>
      %c15_90 = arith.constant 15 : index
      %107 = memref.load %arg2[%c15_90] : memref<98xf32, #tpu.memory_space<smem>>
      %c16_91 = arith.constant 16 : index
      %108 = memref.load %arg2[%c16_91] : memref<98xf32, #tpu.memory_space<smem>>
      %c17_92 = arith.constant 17 : index
      %109 = memref.load %arg2[%c17_92] : memref<98xf32, #tpu.memory_space<smem>>
      %c18_93 = arith.constant 18 : index
      %110 = memref.load %arg2[%c18_93] : memref<98xf32, #tpu.memory_space<smem>>
      %c19 = arith.constant 19 : index
      %111 = memref.load %arg2[%c19] : memref<98xf32, #tpu.memory_space<smem>>
      %c20 = arith.constant 20 : index
      %112 = memref.load %arg2[%c20] : memref<98xf32, #tpu.memory_space<smem>>
      %c21 = arith.constant 21 : index
      %113 = memref.load %arg2[%c21] : memref<98xf32, #tpu.memory_space<smem>>
      %c22 = arith.constant 22 : index
      %114 = memref.load %arg2[%c22] : memref<98xf32, #tpu.memory_space<smem>>
      %c23 = arith.constant 23 : index
      %115 = memref.load %arg2[%c23] : memref<98xf32, #tpu.memory_space<smem>>
      %c24 = arith.constant 24 : index
      %116 = memref.load %arg2[%c24] : memref<98xf32, #tpu.memory_space<smem>>
      %c25 = arith.constant 25 : index
      %117 = memref.load %arg2[%c25] : memref<98xf32, #tpu.memory_space<smem>>
      %c26 = arith.constant 26 : index
      %118 = memref.load %arg2[%c26] : memref<98xf32, #tpu.memory_space<smem>>
      %c27 = arith.constant 27 : index
      %119 = memref.load %arg2[%c27] : memref<98xf32, #tpu.memory_space<smem>>
      %c28 = arith.constant 28 : index
      %120 = memref.load %arg2[%c28] : memref<98xf32, #tpu.memory_space<smem>>
      %c29 = arith.constant 29 : index
      %121 = memref.load %arg2[%c29] : memref<98xf32, #tpu.memory_space<smem>>
      %c30 = arith.constant 30 : index
      %122 = memref.load %arg2[%c30] : memref<98xf32, #tpu.memory_space<smem>>
      %c31 = arith.constant 31 : index
      %123 = memref.load %arg2[%c31] : memref<98xf32, #tpu.memory_space<smem>>
      %c32 = arith.constant 32 : index
      %124 = memref.load %arg2[%c32] : memref<98xf32, #tpu.memory_space<smem>>
      %c33 = arith.constant 33 : index
      %125 = memref.load %arg2[%c33] : memref<98xf32, #tpu.memory_space<smem>>
      %c34 = arith.constant 34 : index
      %126 = memref.load %arg2[%c34] : memref<98xf32, #tpu.memory_space<smem>>
      %c35 = arith.constant 35 : index
      %127 = memref.load %arg2[%c35] : memref<98xf32, #tpu.memory_space<smem>>
      %c36 = arith.constant 36 : index
      %128 = memref.load %arg2[%c36] : memref<98xf32, #tpu.memory_space<smem>>
      %c37 = arith.constant 37 : index
      %129 = memref.load %arg2[%c37] : memref<98xf32, #tpu.memory_space<smem>>
      %c38 = arith.constant 38 : index
      %130 = memref.load %arg2[%c38] : memref<98xf32, #tpu.memory_space<smem>>
      %c39 = arith.constant 39 : index
      %131 = memref.load %arg2[%c39] : memref<98xf32, #tpu.memory_space<smem>>
      %c40 = arith.constant 40 : index
      %132 = memref.load %arg2[%c40] : memref<98xf32, #tpu.memory_space<smem>>
      %c41 = arith.constant 41 : index
      %133 = memref.load %arg2[%c41] : memref<98xf32, #tpu.memory_space<smem>>
      %c42 = arith.constant 42 : index
      %134 = memref.load %arg2[%c42] : memref<98xf32, #tpu.memory_space<smem>>
      %c43 = arith.constant 43 : index
      %135 = memref.load %arg2[%c43] : memref<98xf32, #tpu.memory_space<smem>>
      %c44 = arith.constant 44 : index
      %136 = memref.load %arg2[%c44] : memref<98xf32, #tpu.memory_space<smem>>
      %c45 = arith.constant 45 : index
      %137 = memref.load %arg2[%c45] : memref<98xf32, #tpu.memory_space<smem>>
      %c46 = arith.constant 46 : index
      %138 = memref.load %arg2[%c46] : memref<98xf32, #tpu.memory_space<smem>>
      %c47 = arith.constant 47 : index
      %139 = memref.load %arg2[%c47] : memref<98xf32, #tpu.memory_space<smem>>
      %c48 = arith.constant 48 : index
      %140 = memref.load %arg2[%c48] : memref<98xf32, #tpu.memory_space<smem>>
      %c49 = arith.constant 49 : index
      %141 = memref.load %arg2[%c49] : memref<98xf32, #tpu.memory_space<smem>>
      %c50 = arith.constant 50 : index
      %142 = memref.load %arg2[%c50] : memref<98xf32, #tpu.memory_space<smem>>
      %c51 = arith.constant 51 : index
      %143 = memref.load %arg2[%c51] : memref<98xf32, #tpu.memory_space<smem>>
      %c52 = arith.constant 52 : index
      %144 = memref.load %arg2[%c52] : memref<98xf32, #tpu.memory_space<smem>>
      %c53 = arith.constant 53 : index
      %145 = memref.load %arg2[%c53] : memref<98xf32, #tpu.memory_space<smem>>
      %c54 = arith.constant 54 : index
      %146 = memref.load %arg2[%c54] : memref<98xf32, #tpu.memory_space<smem>>
      %c55 = arith.constant 55 : index
      %147 = memref.load %arg2[%c55] : memref<98xf32, #tpu.memory_space<smem>>
      %c56 = arith.constant 56 : index
      %148 = memref.load %arg2[%c56] : memref<98xf32, #tpu.memory_space<smem>>
      %c57 = arith.constant 57 : index
      %149 = memref.load %arg2[%c57] : memref<98xf32, #tpu.memory_space<smem>>
      %c58 = arith.constant 58 : index
      %150 = memref.load %arg2[%c58] : memref<98xf32, #tpu.memory_space<smem>>
      %c59 = arith.constant 59 : index
      %151 = memref.load %arg2[%c59] : memref<98xf32, #tpu.memory_space<smem>>
      %c60 = arith.constant 60 : index
      %152 = memref.load %arg2[%c60] : memref<98xf32, #tpu.memory_space<smem>>
      %c61 = arith.constant 61 : index
      %153 = memref.load %arg2[%c61] : memref<98xf32, #tpu.memory_space<smem>>
      %c62 = arith.constant 62 : index
      %154 = memref.load %arg2[%c62] : memref<98xf32, #tpu.memory_space<smem>>
      %c63 = arith.constant 63 : index
      %155 = memref.load %arg2[%c63] : memref<98xf32, #tpu.memory_space<smem>>
      %c64 = arith.constant 64 : index
      %156 = memref.load %arg2[%c64] : memref<98xf32, #tpu.memory_space<smem>>
      %c65 = arith.constant 65 : index
      %157 = memref.load %arg2[%c65] : memref<98xf32, #tpu.memory_space<smem>>
      %c66 = arith.constant 66 : index
      %158 = memref.load %arg2[%c66] : memref<98xf32, #tpu.memory_space<smem>>
      %c67 = arith.constant 67 : index
      %159 = memref.load %arg2[%c67] : memref<98xf32, #tpu.memory_space<smem>>
      %c68 = arith.constant 68 : index
      %160 = memref.load %arg2[%c68] : memref<98xf32, #tpu.memory_space<smem>>
      %c69 = arith.constant 69 : index
      %161 = memref.load %arg2[%c69] : memref<98xf32, #tpu.memory_space<smem>>
      %c70 = arith.constant 70 : index
      %162 = memref.load %arg2[%c70] : memref<98xf32, #tpu.memory_space<smem>>
      %c71 = arith.constant 71 : index
      %163 = memref.load %arg2[%c71] : memref<98xf32, #tpu.memory_space<smem>>
      %c72 = arith.constant 72 : index
      %164 = memref.load %arg2[%c72] : memref<98xf32, #tpu.memory_space<smem>>
      %c73 = arith.constant 73 : index
      %165 = memref.load %arg2[%c73] : memref<98xf32, #tpu.memory_space<smem>>
      %c74 = arith.constant 74 : index
      %166 = memref.load %arg2[%c74] : memref<98xf32, #tpu.memory_space<smem>>
      %c75 = arith.constant 75 : index
      %167 = memref.load %arg2[%c75] : memref<98xf32, #tpu.memory_space<smem>>
      %c76 = arith.constant 76 : index
      %168 = memref.load %arg2[%c76] : memref<98xf32, #tpu.memory_space<smem>>
      %c77 = arith.constant 77 : index
      %169 = memref.load %arg2[%c77] : memref<98xf32, #tpu.memory_space<smem>>
      %c78 = arith.constant 78 : index
      %170 = memref.load %arg2[%c78] : memref<98xf32, #tpu.memory_space<smem>>
      %c79 = arith.constant 79 : index
      %171 = memref.load %arg2[%c79] : memref<98xf32, #tpu.memory_space<smem>>
      %c80 = arith.constant 80 : index
      %172 = memref.load %arg2[%c80] : memref<98xf32, #tpu.memory_space<smem>>
      %c81 = arith.constant 81 : index
      %173 = memref.load %arg2[%c81] : memref<98xf32, #tpu.memory_space<smem>>
      %c82 = arith.constant 82 : index
      %174 = memref.load %arg2[%c82] : memref<98xf32, #tpu.memory_space<smem>>
      %c83 = arith.constant 83 : index
      %175 = memref.load %arg2[%c83] : memref<98xf32, #tpu.memory_space<smem>>
      %c84 = arith.constant 84 : index
      %176 = memref.load %arg2[%c84] : memref<98xf32, #tpu.memory_space<smem>>
      %c85 = arith.constant 85 : index
      %177 = memref.load %arg2[%c85] : memref<98xf32, #tpu.memory_space<smem>>
      %c86 = arith.constant 86 : index
      %178 = memref.load %arg2[%c86] : memref<98xf32, #tpu.memory_space<smem>>
      %c87 = arith.constant 87 : index
      %179 = memref.load %arg2[%c87] : memref<98xf32, #tpu.memory_space<smem>>
      %c88 = arith.constant 88 : index
      %180 = memref.load %arg2[%c88] : memref<98xf32, #tpu.memory_space<smem>>
      %c89 = arith.constant 89 : index
      %181 = memref.load %arg2[%c89] : memref<98xf32, #tpu.memory_space<smem>>
      %c90 = arith.constant 90 : index
      %182 = memref.load %arg2[%c90] : memref<98xf32, #tpu.memory_space<smem>>
      %c91 = arith.constant 91 : index
      %183 = memref.load %arg2[%c91] : memref<98xf32, #tpu.memory_space<smem>>
      %c92 = arith.constant 92 : index
      %184 = memref.load %arg2[%c92] : memref<98xf32, #tpu.memory_space<smem>>
      %c93 = arith.constant 93 : index
      %185 = memref.load %arg2[%c93] : memref<98xf32, #tpu.memory_space<smem>>
      %c94 = arith.constant 94 : index
      %186 = memref.load %arg2[%c94] : memref<98xf32, #tpu.memory_space<smem>>
      %c95 = arith.constant 95 : index
      %187 = memref.load %arg2[%c95] : memref<98xf32, #tpu.memory_space<smem>>
      %c96 = arith.constant 96 : index
      %188 = memref.load %arg2[%c96] : memref<98xf32, #tpu.memory_space<smem>>
      %c97 = arith.constant 97 : index
      %189 = memref.load %arg2[%c97] : memref<98xf32, #tpu.memory_space<smem>>
      %190 = vector.extract_strided_slice %90 {offsets = [0, 0], sizes = [22, 16], strides = [1, 1]} : vector<22x22xf32> to vector<22x16xf32>
      %191 = vector.extract_strided_slice %90 {offsets = [0, 1], sizes = [22, 16], strides = [1, 1]} : vector<22x22xf32> to vector<22x16xf32>
      %192 = vector.extract_strided_slice %90 {offsets = [0, 2], sizes = [22, 16], strides = [1, 1]} : vector<22x22xf32> to vector<22x16xf32>
      %193 = vector.extract_strided_slice %90 {offsets = [0, 3], sizes = [22, 16], strides = [1, 1]} : vector<22x22xf32> to vector<22x16xf32>
      %194 = vector.extract_strided_slice %90 {offsets = [0, 4], sizes = [22, 16], strides = [1, 1]} : vector<22x22xf32> to vector<22x16xf32>
      %195 = vector.extract_strided_slice %90 {offsets = [0, 5], sizes = [22, 16], strides = [1, 1]} : vector<22x22xf32> to vector<22x16xf32>
      %196 = vector.extract_strided_slice %90 {offsets = [0, 6], sizes = [22, 16], strides = [1, 1]} : vector<22x22xf32> to vector<22x16xf32>
      %197 = vector.extract_strided_slice %91 {offsets = [0, 0], sizes = [22, 16], strides = [1, 1]} : vector<22x22xf32> to vector<22x16xf32>
      %198 = vector.extract_strided_slice %91 {offsets = [0, 1], sizes = [22, 16], strides = [1, 1]} : vector<22x22xf32> to vector<22x16xf32>
      %199 = vector.extract_strided_slice %91 {offsets = [0, 2], sizes = [22, 16], strides = [1, 1]} : vector<22x22xf32> to vector<22x16xf32>
      %200 = vector.extract_strided_slice %91 {offsets = [0, 3], sizes = [22, 16], strides = [1, 1]} : vector<22x22xf32> to vector<22x16xf32>
      %201 = vector.extract_strided_slice %91 {offsets = [0, 4], sizes = [22, 16], strides = [1, 1]} : vector<22x22xf32> to vector<22x16xf32>
      %202 = vector.extract_strided_slice %91 {offsets = [0, 5], sizes = [22, 16], strides = [1, 1]} : vector<22x22xf32> to vector<22x16xf32>
      %203 = vector.extract_strided_slice %91 {offsets = [0, 6], sizes = [22, 16], strides = [1, 1]} : vector<22x22xf32> to vector<22x16xf32>
      %cst_94 = arith.constant 0.000000e+00 : f32
      %204 = vector.broadcast %cst_94 : f32 to vector<16x16xf32>
      %205 = vector.broadcast %92 : f32 to vector<22x16xf32>
      %206 = arith.mulf %205, %190 : vector<22x16xf32>
      %207 = vector.broadcast %141 : f32 to vector<22x16xf32>
      %208 = arith.mulf %207, %197 : vector<22x16xf32>
      %209 = arith.addf %206, %208 : vector<22x16xf32>
      %210 = vector.broadcast %93 : f32 to vector<22x16xf32>
      %211 = arith.mulf %210, %191 : vector<22x16xf32>
      %212 = vector.broadcast %142 : f32 to vector<22x16xf32>
      %213 = arith.mulf %212, %198 : vector<22x16xf32>
      %214 = arith.addf %211, %213 : vector<22x16xf32>
      %215 = vector.broadcast %94 : f32 to vector<22x16xf32>
      %216 = arith.mulf %215, %192 : vector<22x16xf32>
      %217 = vector.broadcast %143 : f32 to vector<22x16xf32>
      %218 = arith.mulf %217, %199 : vector<22x16xf32>
      %219 = arith.addf %216, %218 : vector<22x16xf32>
      %220 = vector.broadcast %95 : f32 to vector<22x16xf32>
      %221 = arith.mulf %220, %193 : vector<22x16xf32>
      %222 = vector.broadcast %144 : f32 to vector<22x16xf32>
      %223 = arith.mulf %222, %200 : vector<22x16xf32>
      %224 = arith.addf %221, %223 : vector<22x16xf32>
      %225 = vector.broadcast %96 : f32 to vector<22x16xf32>
      %226 = arith.mulf %225, %194 : vector<22x16xf32>
      %227 = vector.broadcast %145 : f32 to vector<22x16xf32>
      %228 = arith.mulf %227, %201 : vector<22x16xf32>
      %229 = arith.addf %226, %228 : vector<22x16xf32>
      %230 = vector.broadcast %97 : f32 to vector<22x16xf32>
      %231 = arith.mulf %230, %195 : vector<22x16xf32>
      %232 = vector.broadcast %146 : f32 to vector<22x16xf32>
      %233 = arith.mulf %232, %202 : vector<22x16xf32>
      %234 = arith.addf %231, %233 : vector<22x16xf32>
      %235 = vector.broadcast %98 : f32 to vector<22x16xf32>
      %236 = arith.mulf %235, %196 : vector<22x16xf32>
      %237 = vector.broadcast %147 : f32 to vector<22x16xf32>
      %238 = arith.mulf %237, %203 : vector<22x16xf32>
      %239 = arith.addf %236, %238 : vector<22x16xf32>
      %240 = arith.addf %209, %214 : vector<22x16xf32>
      %241 = arith.addf %219, %224 : vector<22x16xf32>
      %242 = arith.addf %240, %241 : vector<22x16xf32>
      %243 = arith.addf %229, %234 : vector<22x16xf32>
      %244 = arith.addf %243, %239 : vector<22x16xf32>
      %245 = arith.addf %242, %244 : vector<22x16xf32>
      %246 = vector.extract_strided_slice %245 {offsets = [0, 0], sizes = [16, 16], strides = [1, 1]} : vector<22x16xf32> to vector<16x16xf32>
      %247 = arith.addf %204, %246 : vector<16x16xf32>
      %248 = vector.broadcast %99 : f32 to vector<22x16xf32>
      %249 = arith.mulf %248, %190 : vector<22x16xf32>
      %250 = vector.broadcast %148 : f32 to vector<22x16xf32>
      %251 = arith.mulf %250, %197 : vector<22x16xf32>
      %252 = arith.addf %249, %251 : vector<22x16xf32>
      %253 = vector.broadcast %100 : f32 to vector<22x16xf32>
      %254 = arith.mulf %253, %191 : vector<22x16xf32>
      %255 = vector.broadcast %149 : f32 to vector<22x16xf32>
      %256 = arith.mulf %255, %198 : vector<22x16xf32>
      %257 = arith.addf %254, %256 : vector<22x16xf32>
      %258 = vector.broadcast %101 : f32 to vector<22x16xf32>
      %259 = arith.mulf %258, %192 : vector<22x16xf32>
      %260 = vector.broadcast %150 : f32 to vector<22x16xf32>
      %261 = arith.mulf %260, %199 : vector<22x16xf32>
      %262 = arith.addf %259, %261 : vector<22x16xf32>
      %263 = vector.broadcast %102 : f32 to vector<22x16xf32>
      %264 = arith.mulf %263, %193 : vector<22x16xf32>
      %265 = vector.broadcast %151 : f32 to vector<22x16xf32>
      %266 = arith.mulf %265, %200 : vector<22x16xf32>
      %267 = arith.addf %264, %266 : vector<22x16xf32>
      %268 = vector.broadcast %103 : f32 to vector<22x16xf32>
      %269 = arith.mulf %268, %194 : vector<22x16xf32>
      %270 = vector.broadcast %152 : f32 to vector<22x16xf32>
      %271 = arith.mulf %270, %201 : vector<22x16xf32>
      %272 = arith.addf %269, %271 : vector<22x16xf32>
      %273 = vector.broadcast %104 : f32 to vector<22x16xf32>
      %274 = arith.mulf %273, %195 : vector<22x16xf32>
      %275 = vector.broadcast %153 : f32 to vector<22x16xf32>
      %276 = arith.mulf %275, %202 : vector<22x16xf32>
      %277 = arith.addf %274, %276 : vector<22x16xf32>
      %278 = vector.broadcast %105 : f32 to vector<22x16xf32>
      %279 = arith.mulf %278, %196 : vector<22x16xf32>
      %280 = vector.broadcast %154 : f32 to vector<22x16xf32>
      %281 = arith.mulf %280, %203 : vector<22x16xf32>
      %282 = arith.addf %279, %281 : vector<22x16xf32>
      %283 = arith.addf %252, %257 : vector<22x16xf32>
      %284 = arith.addf %262, %267 : vector<22x16xf32>
      %285 = arith.addf %283, %284 : vector<22x16xf32>
      %286 = arith.addf %272, %277 : vector<22x16xf32>
      %287 = arith.addf %286, %282 : vector<22x16xf32>
      %288 = arith.addf %285, %287 : vector<22x16xf32>
      %289 = vector.extract_strided_slice %288 {offsets = [1, 0], sizes = [16, 16], strides = [1, 1]} : vector<22x16xf32> to vector<16x16xf32>
      %290 = arith.addf %247, %289 : vector<16x16xf32>
      %291 = vector.broadcast %106 : f32 to vector<22x16xf32>
      %292 = arith.mulf %291, %190 : vector<22x16xf32>
      %293 = vector.broadcast %155 : f32 to vector<22x16xf32>
      %294 = arith.mulf %293, %197 : vector<22x16xf32>
      %295 = arith.addf %292, %294 : vector<22x16xf32>
      %296 = vector.broadcast %107 : f32 to vector<22x16xf32>
      %297 = arith.mulf %296, %191 : vector<22x16xf32>
      %298 = vector.broadcast %156 : f32 to vector<22x16xf32>
      %299 = arith.mulf %298, %198 : vector<22x16xf32>
      %300 = arith.addf %297, %299 : vector<22x16xf32>
      %301 = vector.broadcast %108 : f32 to vector<22x16xf32>
      %302 = arith.mulf %301, %192 : vector<22x16xf32>
      %303 = vector.broadcast %157 : f32 to vector<22x16xf32>
      %304 = arith.mulf %303, %199 : vector<22x16xf32>
      %305 = arith.addf %302, %304 : vector<22x16xf32>
      %306 = vector.broadcast %109 : f32 to vector<22x16xf32>
      %307 = arith.mulf %306, %193 : vector<22x16xf32>
      %308 = vector.broadcast %158 : f32 to vector<22x16xf32>
      %309 = arith.mulf %308, %200 : vector<22x16xf32>
      %310 = arith.addf %307, %309 : vector<22x16xf32>
      %311 = vector.broadcast %110 : f32 to vector<22x16xf32>
      %312 = arith.mulf %311, %194 : vector<22x16xf32>
      %313 = vector.broadcast %159 : f32 to vector<22x16xf32>
      %314 = arith.mulf %313, %201 : vector<22x16xf32>
      %315 = arith.addf %312, %314 : vector<22x16xf32>
      %316 = vector.broadcast %111 : f32 to vector<22x16xf32>
      %317 = arith.mulf %316, %195 : vector<22x16xf32>
      %318 = vector.broadcast %160 : f32 to vector<22x16xf32>
      %319 = arith.mulf %318, %202 : vector<22x16xf32>
      %320 = arith.addf %317, %319 : vector<22x16xf32>
      %321 = vector.broadcast %112 : f32 to vector<22x16xf32>
      %322 = arith.mulf %321, %196 : vector<22x16xf32>
      %323 = vector.broadcast %161 : f32 to vector<22x16xf32>
      %324 = arith.mulf %323, %203 : vector<22x16xf32>
      %325 = arith.addf %322, %324 : vector<22x16xf32>
      %326 = arith.addf %295, %300 : vector<22x16xf32>
      %327 = arith.addf %305, %310 : vector<22x16xf32>
      %328 = arith.addf %326, %327 : vector<22x16xf32>
      %329 = arith.addf %315, %320 : vector<22x16xf32>
      %330 = arith.addf %329, %325 : vector<22x16xf32>
      %331 = arith.addf %328, %330 : vector<22x16xf32>
      %332 = vector.extract_strided_slice %331 {offsets = [2, 0], sizes = [16, 16], strides = [1, 1]} : vector<22x16xf32> to vector<16x16xf32>
      %333 = arith.addf %290, %332 : vector<16x16xf32>
      %334 = vector.broadcast %113 : f32 to vector<22x16xf32>
      %335 = arith.mulf %334, %190 : vector<22x16xf32>
      %336 = vector.broadcast %162 : f32 to vector<22x16xf32>
      %337 = arith.mulf %336, %197 : vector<22x16xf32>
      %338 = arith.addf %335, %337 : vector<22x16xf32>
      %339 = vector.broadcast %114 : f32 to vector<22x16xf32>
      %340 = arith.mulf %339, %191 : vector<22x16xf32>
      %341 = vector.broadcast %163 : f32 to vector<22x16xf32>
      %342 = arith.mulf %341, %198 : vector<22x16xf32>
      %343 = arith.addf %340, %342 : vector<22x16xf32>
      %344 = vector.broadcast %115 : f32 to vector<22x16xf32>
      %345 = arith.mulf %344, %192 : vector<22x16xf32>
      %346 = vector.broadcast %164 : f32 to vector<22x16xf32>
      %347 = arith.mulf %346, %199 : vector<22x16xf32>
      %348 = arith.addf %345, %347 : vector<22x16xf32>
      %349 = vector.broadcast %116 : f32 to vector<22x16xf32>
      %350 = arith.mulf %349, %193 : vector<22x16xf32>
      %351 = vector.broadcast %165 : f32 to vector<22x16xf32>
      %352 = arith.mulf %351, %200 : vector<22x16xf32>
      %353 = arith.addf %350, %352 : vector<22x16xf32>
      %354 = vector.broadcast %117 : f32 to vector<22x16xf32>
      %355 = arith.mulf %354, %194 : vector<22x16xf32>
      %356 = vector.broadcast %166 : f32 to vector<22x16xf32>
      %357 = arith.mulf %356, %201 : vector<22x16xf32>
      %358 = arith.addf %355, %357 : vector<22x16xf32>
      %359 = vector.broadcast %118 : f32 to vector<22x16xf32>
      %360 = arith.mulf %359, %195 : vector<22x16xf32>
      %361 = vector.broadcast %167 : f32 to vector<22x16xf32>
      %362 = arith.mulf %361, %202 : vector<22x16xf32>
      %363 = arith.addf %360, %362 : vector<22x16xf32>
      %364 = vector.broadcast %119 : f32 to vector<22x16xf32>
      %365 = arith.mulf %364, %196 : vector<22x16xf32>
      %366 = vector.broadcast %168 : f32 to vector<22x16xf32>
      %367 = arith.mulf %366, %203 : vector<22x16xf32>
      %368 = arith.addf %365, %367 : vector<22x16xf32>
      %369 = arith.addf %338, %343 : vector<22x16xf32>
      %370 = arith.addf %348, %353 : vector<22x16xf32>
      %371 = arith.addf %369, %370 : vector<22x16xf32>
      %372 = arith.addf %358, %363 : vector<22x16xf32>
      %373 = arith.addf %372, %368 : vector<22x16xf32>
      %374 = arith.addf %371, %373 : vector<22x16xf32>
      %375 = vector.extract_strided_slice %374 {offsets = [3, 0], sizes = [16, 16], strides = [1, 1]} : vector<22x16xf32> to vector<16x16xf32>
      %376 = arith.addf %333, %375 : vector<16x16xf32>
      %377 = vector.broadcast %120 : f32 to vector<22x16xf32>
      %378 = arith.mulf %377, %190 : vector<22x16xf32>
      %379 = vector.broadcast %169 : f32 to vector<22x16xf32>
      %380 = arith.mulf %379, %197 : vector<22x16xf32>
      %381 = arith.addf %378, %380 : vector<22x16xf32>
      %382 = vector.broadcast %121 : f32 to vector<22x16xf32>
      %383 = arith.mulf %382, %191 : vector<22x16xf32>
      %384 = vector.broadcast %170 : f32 to vector<22x16xf32>
      %385 = arith.mulf %384, %198 : vector<22x16xf32>
      %386 = arith.addf %383, %385 : vector<22x16xf32>
      %387 = vector.broadcast %122 : f32 to vector<22x16xf32>
      %388 = arith.mulf %387, %192 : vector<22x16xf32>
      %389 = vector.broadcast %171 : f32 to vector<22x16xf32>
      %390 = arith.mulf %389, %199 : vector<22x16xf32>
      %391 = arith.addf %388, %390 : vector<22x16xf32>
      %392 = vector.broadcast %123 : f32 to vector<22x16xf32>
      %393 = arith.mulf %392, %193 : vector<22x16xf32>
      %394 = vector.broadcast %172 : f32 to vector<22x16xf32>
      %395 = arith.mulf %394, %200 : vector<22x16xf32>
      %396 = arith.addf %393, %395 : vector<22x16xf32>
      %397 = vector.broadcast %124 : f32 to vector<22x16xf32>
      %398 = arith.mulf %397, %194 : vector<22x16xf32>
      %399 = vector.broadcast %173 : f32 to vector<22x16xf32>
      %400 = arith.mulf %399, %201 : vector<22x16xf32>
      %401 = arith.addf %398, %400 : vector<22x16xf32>
      %402 = vector.broadcast %125 : f32 to vector<22x16xf32>
      %403 = arith.mulf %402, %195 : vector<22x16xf32>
      %404 = vector.broadcast %174 : f32 to vector<22x16xf32>
      %405 = arith.mulf %404, %202 : vector<22x16xf32>
      %406 = arith.addf %403, %405 : vector<22x16xf32>
      %407 = vector.broadcast %126 : f32 to vector<22x16xf32>
      %408 = arith.mulf %407, %196 : vector<22x16xf32>
      %409 = vector.broadcast %175 : f32 to vector<22x16xf32>
      %410 = arith.mulf %409, %203 : vector<22x16xf32>
      %411 = arith.addf %408, %410 : vector<22x16xf32>
      %412 = arith.addf %381, %386 : vector<22x16xf32>
      %413 = arith.addf %391, %396 : vector<22x16xf32>
      %414 = arith.addf %412, %413 : vector<22x16xf32>
      %415 = arith.addf %401, %406 : vector<22x16xf32>
      %416 = arith.addf %415, %411 : vector<22x16xf32>
      %417 = arith.addf %414, %416 : vector<22x16xf32>
      %418 = vector.extract_strided_slice %417 {offsets = [4, 0], sizes = [16, 16], strides = [1, 1]} : vector<22x16xf32> to vector<16x16xf32>
      %419 = arith.addf %376, %418 : vector<16x16xf32>
      %420 = vector.broadcast %127 : f32 to vector<22x16xf32>
      %421 = arith.mulf %420, %190 : vector<22x16xf32>
      %422 = vector.broadcast %176 : f32 to vector<22x16xf32>
      %423 = arith.mulf %422, %197 : vector<22x16xf32>
      %424 = arith.addf %421, %423 : vector<22x16xf32>
      %425 = vector.broadcast %128 : f32 to vector<22x16xf32>
      %426 = arith.mulf %425, %191 : vector<22x16xf32>
      %427 = vector.broadcast %177 : f32 to vector<22x16xf32>
      %428 = arith.mulf %427, %198 : vector<22x16xf32>
      %429 = arith.addf %426, %428 : vector<22x16xf32>
      %430 = vector.broadcast %129 : f32 to vector<22x16xf32>
      %431 = arith.mulf %430, %192 : vector<22x16xf32>
      %432 = vector.broadcast %178 : f32 to vector<22x16xf32>
      %433 = arith.mulf %432, %199 : vector<22x16xf32>
      %434 = arith.addf %431, %433 : vector<22x16xf32>
      %435 = vector.broadcast %130 : f32 to vector<22x16xf32>
      %436 = arith.mulf %435, %193 : vector<22x16xf32>
      %437 = vector.broadcast %179 : f32 to vector<22x16xf32>
      %438 = arith.mulf %437, %200 : vector<22x16xf32>
      %439 = arith.addf %436, %438 : vector<22x16xf32>
      %440 = vector.broadcast %131 : f32 to vector<22x16xf32>
      %441 = arith.mulf %440, %194 : vector<22x16xf32>
      %442 = vector.broadcast %180 : f32 to vector<22x16xf32>
      %443 = arith.mulf %442, %201 : vector<22x16xf32>
      %444 = arith.addf %441, %443 : vector<22x16xf32>
      %445 = vector.broadcast %132 : f32 to vector<22x16xf32>
      %446 = arith.mulf %445, %195 : vector<22x16xf32>
      %447 = vector.broadcast %181 : f32 to vector<22x16xf32>
      %448 = arith.mulf %447, %202 : vector<22x16xf32>
      %449 = arith.addf %446, %448 : vector<22x16xf32>
      %450 = vector.broadcast %133 : f32 to vector<22x16xf32>
      %451 = arith.mulf %450, %196 : vector<22x16xf32>
      %452 = vector.broadcast %182 : f32 to vector<22x16xf32>
      %453 = arith.mulf %452, %203 : vector<22x16xf32>
      %454 = arith.addf %451, %453 : vector<22x16xf32>
      %455 = arith.addf %424, %429 : vector<22x16xf32>
      %456 = arith.addf %434, %439 : vector<22x16xf32>
      %457 = arith.addf %455, %456 : vector<22x16xf32>
      %458 = arith.addf %444, %449 : vector<22x16xf32>
      %459 = arith.addf %458, %454 : vector<22x16xf32>
      %460 = arith.addf %457, %459 : vector<22x16xf32>
      %461 = vector.extract_strided_slice %460 {offsets = [5, 0], sizes = [16, 16], strides = [1, 1]} : vector<22x16xf32> to vector<16x16xf32>
      %462 = arith.addf %419, %461 : vector<16x16xf32>
      %463 = vector.broadcast %134 : f32 to vector<22x16xf32>
      %464 = arith.mulf %463, %190 : vector<22x16xf32>
      %465 = vector.broadcast %183 : f32 to vector<22x16xf32>
      %466 = arith.mulf %465, %197 : vector<22x16xf32>
      %467 = arith.addf %464, %466 : vector<22x16xf32>
      %468 = vector.broadcast %135 : f32 to vector<22x16xf32>
      %469 = arith.mulf %468, %191 : vector<22x16xf32>
      %470 = vector.broadcast %184 : f32 to vector<22x16xf32>
      %471 = arith.mulf %470, %198 : vector<22x16xf32>
      %472 = arith.addf %469, %471 : vector<22x16xf32>
      %473 = vector.broadcast %136 : f32 to vector<22x16xf32>
      %474 = arith.mulf %473, %192 : vector<22x16xf32>
      %475 = vector.broadcast %185 : f32 to vector<22x16xf32>
      %476 = arith.mulf %475, %199 : vector<22x16xf32>
      %477 = arith.addf %474, %476 : vector<22x16xf32>
      %478 = vector.broadcast %137 : f32 to vector<22x16xf32>
      %479 = arith.mulf %478, %193 : vector<22x16xf32>
      %480 = vector.broadcast %186 : f32 to vector<22x16xf32>
      %481 = arith.mulf %480, %200 : vector<22x16xf32>
      %482 = arith.addf %479, %481 : vector<22x16xf32>
      %483 = vector.broadcast %138 : f32 to vector<22x16xf32>
      %484 = arith.mulf %483, %194 : vector<22x16xf32>
      %485 = vector.broadcast %187 : f32 to vector<22x16xf32>
      %486 = arith.mulf %485, %201 : vector<22x16xf32>
      %487 = arith.addf %484, %486 : vector<22x16xf32>
      %488 = vector.broadcast %139 : f32 to vector<22x16xf32>
      %489 = arith.mulf %488, %195 : vector<22x16xf32>
      %490 = vector.broadcast %188 : f32 to vector<22x16xf32>
      %491 = arith.mulf %490, %202 : vector<22x16xf32>
      %492 = arith.addf %489, %491 : vector<22x16xf32>
      %493 = vector.broadcast %140 : f32 to vector<22x16xf32>
      %494 = arith.mulf %493, %196 : vector<22x16xf32>
      %495 = vector.broadcast %189 : f32 to vector<22x16xf32>
      %496 = arith.mulf %495, %203 : vector<22x16xf32>
      %497 = arith.addf %494, %496 : vector<22x16xf32>
      %498 = arith.addf %467, %472 : vector<22x16xf32>
      %499 = arith.addf %477, %482 : vector<22x16xf32>
      %500 = arith.addf %498, %499 : vector<22x16xf32>
      %501 = arith.addf %487, %492 : vector<22x16xf32>
      %502 = arith.addf %501, %497 : vector<22x16xf32>
      %503 = arith.addf %500, %502 : vector<22x16xf32>
      %504 = vector.extract_strided_slice %503 {offsets = [6, 0], sizes = [16, 16], strides = [1, 1]} : vector<22x16xf32> to vector<16x16xf32>
      %505 = arith.addf %462, %504 : vector<16x16xf32>
      %506 = arith.negf %505 : vector<16x16xf32>
      %507 = math.exp %506 : vector<16x16xf32>
      %cst_95 = arith.constant 1.000000e+00 : f32
      %508 = vector.broadcast %cst_95 : f32 to vector<16x16xf32>
      %509 = arith.addf %508, %507 : vector<16x16xf32>
      %510 = arith.divf %508, %509 : vector<16x16xf32>
      %c0_96 = arith.constant 0 : index
      %c0_97 = arith.constant 0 : index
      %c0_98 = arith.constant 0 : index
      %c0_99 = arith.constant 0 : index
      %511 = vector.load %arg4[%c0_96, %c0_97, %c0_98, %c0_99] : memref<1x1x16x16xf32, #tpu.memory_space<vmem>>, vector<1x1x16x16xf32>
      %512 = vector.shape_cast %511 : vector<1x1x16x16xf32> to vector<16x16xf32>
      %513 = vector.shape_cast %510 : vector<16x16xf32> to vector<1x1x16x16xf32>
      tpu.vector_store %arg4[%c0_96, %c0_97, %c0_98, %c0_99], %513 {strides = array<i32>} : memref<1x1x16x16xf32, #tpu.memory_space<vmem>>, vector<1x1x16x16xf32>,
    } else {
    }
    return
  }
  func.func @transform_0(%arg0: i32, %arg1: i32) -> i32 {
    %c0_i32 = arith.constant 0 : i32
    %c0_i32_0 = arith.constant 0 : i32
    return %c0_i32 : i32
  }
  func.func @transform_1(%arg0: i32, %arg1: i32) -> (i32, i32, i32) {
    %c0_i32 = arith.constant 0 : i32
    %c0_i32_0 = arith.constant 0 : i32
    return %arg0, %arg1, %c0_i32 : i32, i32, i32
  }
  func.func @transform_2(%arg0: i32, %arg1: i32) -> (i32, i32, i32, i32) {
    %c0_i32 = arith.constant 0 : i32
    %c0_i32_0 = arith.constant 0 : i32
    %c0_i32_1 = arith.constant 0 : i32
    %c0_i32_2 = arith.constant 0 : i32
    return %arg0, %c0_i32, %c0_i32_0, %c0_i32_1 : i32, i32, i32, i32
  }
}

</mosaic_0001>

<llo_original>
// kernel: tpu_custom_call.1
$region0: #{tpu_custom_call.1}
  #allocation0 [shape = 'u32[]', space=smem, size = 0x4, offset = 0x4, fixed_abs, tag = 'smem constant byte address 0x4 - core index']
  #allocation1 [shape = 'u32[144,128]{1,0:T(1,128)}', space=vmem, size = 0x12000, scoped, tag = 'internal scratch']
  #allocation2 [shape = 'f32[1,256]{1,0:T(1,128)}', space=vmem, size = 0x400, scoped, tag = 'scratch operand']
  #allocation3 [shape = 'f32[1,256]{1,0:T(1,128)}', space=vmem, size = 0x400, scoped, tag = 'scratch operand']
  #allocation4 [shape = 'f32[22,22]{1,0:T(8,128)}', space=vmem, size = 0x3000, scoped, tag = 'scratch operand']
  #allocation5 [shape = 'f32[22,22]{1,0:T(8,128)}', space=vmem, size = 0x3000, scoped, tag = 'scratch operand']
  %s0 = inlined_call_operand.hbm [shape: f32[98], index: 0, kind: input, shape index: {}]
  %s1 = inlined_call_operand.hbm [shape: f32[2,4,256], index: 1, kind: input, shape index: {}]
  %s2 = inlined_call_operand.hbm [shape: f32[2,1,16,16], index: 2, kind: output, shape index: {}]
  %s3 = sld [smem:[#allocation0]]
  $region57: #{tpu_custom_call.1} parent=0
    _
  %s5 = ssub.s32 1, %s3
  %s6 = scalar_select 0, %s5, %s3
  $region1: #{tpu_custom_call.1} parent=0
    #allocation6 [shape = 'u8[512]{0}', space=smem, size = 0x200, scoped, tag = 'input window, operand 0, single buffered']
    #allocation7 [shape = 's32[2]{0}', space=sflag, size = 0x8, scoped, tag = 'scoped memory for tpu_custom_call.1']
    #allocation8 [shape = 's32[2]{0}', space=sflag, size = 0x8, scoped, tag = 'scoped memory for tpu_custom_call.1']
    #allocation9 [shape = 's32[2]{0}', space=sflag, size = 0x8, scoped, tag = 'scoped memory for tpu_custom_call.1']
    #allocation10 [shape = 'u8[8192]{0}', space=vmem, size = 0x2000, scoped, tag = 'input window, operand 1']
    #allocation11 [shape = 'u8[16384]{0}', space=vmem, size = 0x4000, scoped, tag = 'output window, operand 0']
    %7 = vsyncpa [#allocation9], 0
    %8 = vsyncpa [#allocation7], 0
    %s9 = scalar_lea.sflag [#allocation7], 1
    %10 = vsyncpa %s9, 0
    %11 = vsyncpa [#allocation8], 0
    %s12 = scalar_lea.sflag [#allocation8], 1
    %13 = vsyncpa %s12, 0
    loop: start=0, step=1, limit=4
    $region2: #{tpu_custom_call.1} parent=1 // loop_pre_header
      _
    $region3: #{tpu_custom_call.1} parent=1 // loop_header
      %s15 = sphi 0, %s19
      %p16 = scmp.ge.s32.totalorder %s15, 4
      %s22 = sphi 0, %s34
      %s23 = sphi 0, %s30
      %s24 = sphi 0, %s22
      %s25 = sphi 0, %s23
      %s26 = sphi 0, %s24
      %s27 = sphi 0, %s25
      %s35 = sphi 0, %s35
      %s37 = sphi 0, %s35
      %s38 = sphi 0, %s37
      %s52 = sphi 0, %s38
      %s60 = sphi 0, %s62
      %s63 = sphi 0, %s60
      %s64 = sphi 0, %s63
      %s80 = sphi 0, %s64
      %s86 = sphi 0, %s88
      %s89 = sphi 0, %s86
      %s90 = sphi 0, %s89
      %s106 = sphi 0, %s90
    $region4: #{tpu_custom_call.1} parent=1 // loop_header_branch
      %18 = sbr.rel (%p16) target = $region8
    $region5: #{tpu_custom_call.1} parent=1 // loop_body
      %s20 = ssub.s32 %s15, 1
      %s21 = ssub.s32 %s15, 2
      %s28 = sadd.s32 1, %s23
      %p29 = scmp.ge.s32.totalorder %s28, 1
      %s30 = scalar_select %p29, 0, %s28
      %s31 = sadd.s32 1, %s22
      %s32 = scalar_select %p29, %s31, %s22
      %p33 = scmp.ge.s32.totalorder %s32, 2
      %s34 = scalar_select %p33, 0, %s32
      %s36 = sadd.s32 %s35, 1
      %p39 = scmp.eq.s32.totalorder %s15, 1
      %p40 = scmp.ne.s32.totalorder %s35, %s37
      %p41 = scmp.eq.s32.totalorder %s15, 0
      %p42 = por %p40, %p41
      %p43 = scmp.ne.s32.totalorder %s35, %s37
      %p44 = scmp.eq.s32.totalorder %s20, 1
      %p45 = por %p43, %p44
      %p46 = scmp.ne.s32.totalorder %s37, %s38
      %p47 = scmp.eq.s32.totalorder %s20, 0
      %p48 = por %p46, %p47
      %p49 = scmp.ne.s32.totalorder %s37, %s38
      %p50 = scmp.eq.s32.totalorder %s21, 1
      %p51 = por %p49, %p50
      %p53 = scmp.ne.s32.totalorder %s38, %s52
      %p54 = scmp.eq.s32.totalorder %s21, 0
      %p55 = por %p53, %p54
      %s56 = ssub.s32 %s22, %s34
      %s57 = ssub.s32 %s23, %s30
      %s58 = sor.u32 %s56, %s57
      %p59 = scmp.eq.s32.totalorder %s58, 0
      %s61 = sadd.s32 %s60, 1
      %s62 = scalar_select %p59, %s60, %s61
      %p65 = pneg %p59
      %p66 = scmp.eq.s32.totalorder %s15, 1
      %p67 = por %p65, %p66
      %p68 = scmp.ne.s32.totalorder %s60, %s63
      %p69 = scmp.eq.s32.totalorder %s15, 0
      %p70 = por %p68, %p69
      %p71 = scmp.ne.s32.totalorder %s60, %s63
      %p72 = scmp.eq.s32.totalorder %s20, 1
      %p73 = por %p71, %p72
      %p74 = scmp.ne.s32.totalorder %s63, %s64
      %p75 = scmp.eq.s32.totalorder %s20, 0
      %p76 = por %p74, %p75
      %p77 = scmp.ne.s32.totalorder %s63, %s64
      %p78 = scmp.eq.s32.totalorder %s21, 1
      %p79 = por %p77, %p78
      %p81 = scmp.ne.s32.totalorder %s64, %s80
      %p82 = scmp.eq.s32.totalorder %s21, 0
      %p83 = por %p81, %p82
      %s84 = ssub.s32 %s22, %s34
      %p85 = scmp.eq.s32.totalorder %s84, 0
      %s87 = sadd.s32 %s86, 1
      %s88 = scalar_select %p85, %s86, %s87
      %p91 = pneg %p85
      %p92 = scmp.eq.s32.totalorder %s15, 1
      %p93 = por %p91, %p92
      %p94 = scmp.ne.s32.totalorder %s86, %s89
      %p95 = scmp.eq.s32.totalorder %s15, 0
      %p96 = por %p94, %p95
      %p97 = scmp.ne.s32.totalorder %s86, %s89
      %p98 = scmp.eq.s32.totalorder %s20, 1
      %p99 = por %p97, %p98
      %p100 = scmp.ne.s32.totalorder %s89, %s90
      %p101 = scmp.eq.s32.totalorder %s20, 0
      %p102 = por %p100, %p101
      %p103 = scmp.ne.s32.totalorder %s89, %s90
      %p104 = scmp.eq.s32.totalorder %s21, 1
      %p105 = por %p103, %p104
      %p107 = scmp.ne.s32.totalorder %s90, %s106
      %p108 = scmp.eq.s32.totalorder %s21, 0
      %p109 = por %p107, %p108
      %p110 = scmp.le.s32.totalorder 1, %s15
      %p111 = scmp.lt.s32.totalorder %s15, 3
      %p112 = pnand %p110, %p111
      %p113 = pneg %p112
      // Predicated region
      $region9: #{tpu_custom_call.1} parent=5 // pred_check
        _
      $region10: #{tpu_custom_call.1} parent=5 // pred_check_branch
        %115 = sbr.rel (%p112) target = $region12
      $region11: #{tpu_custom_call.1} parent=5 // pred_region
        %s116 = ssub.s32 %s15, 1
        // Predicated region
        $region13: #{tpu_custom_call.1} parent=11 // pred_check
          %p117 = pneg %p48
        $region14: #{tpu_custom_call.1} parent=11 // pred_check_branch
          %119 = sbr.rel (%p117) target = $region16
        $region15: #{tpu_custom_call.1} parent=11 // pred_region
          %s121 = ssub.s32 16, 16
          %122 = vsyncadd [#allocation9], %s121
          %125 = dma.hbm_to_smem %s0, 16, [#allocation6], [#allocation9]
        $region16: #{tpu_custom_call.1} parent=11 // pred_fallthru
          _
      $region12: #{tpu_custom_call.1} parent=5 // pred_fallthru
        _
      %p126 = scmp.lt.s32.totalorder %s15, 2
      // Predicated region
      $region17: #{tpu_custom_call.1} parent=5 // pred_check
        %p127 = pneg %p126
      $region18: #{tpu_custom_call.1} parent=5 // pred_check_branch
        %129 = sbr.rel (%p127) target = $region20
      $region19: #{tpu_custom_call.1} parent=5 // pred_region
        // Predicated region
        $region21: #{tpu_custom_call.1} parent=19 // pred_check
          %p130 = pneg %p70
        $region22: #{tpu_custom_call.1} parent=19 // pred_check_branch
          %132 = sbr.rel (%p130) target = $region24
        $region23: #{tpu_custom_call.1} parent=19 // pred_region
          %s133 = sand.u32 %s60, 1
          %s134 = scalar_lea.sflag [#allocation7], %s133
          %s135 = sand.u32 %s60, 1
          %s136 = smul.addr %s135, 8
          %s137 = scalar_lea.vmem [#allocation10], %s136
          %s139 = ssub.s32 128, 128
          %140 = vsyncadd %s134, %s139
          %s141 = smul.addr %s23, 2
          %s142 = smul.addr %s22, 2
          %s143 = sadd.s32 %s141, %s142
          %s144 = smul.addr %s143, 64
          %s145 = scalar_lea.hbm %s1, %s144
          %s147 = sshll.u32 %s137, 4
          %s148 = int_to_ptr.vmem [resolvable:$true] %s147
          %150 = dma.hbm_to_vmem [thread:$0]  %s145, 128, %s148, %s134
        $region24: #{tpu_custom_call.1} parent=19 // pred_fallthru
          _
      $region20: #{tpu_custom_call.1} parent=5 // pred_fallthru
        _
      %p151 = scmp.le.s32.totalorder 1, %s15
      %p152 = scmp.lt.s32.totalorder %s15, 3
      %p153 = pnand %p151, %p152
      %p154 = pneg %p153
      // Predicated region
      $region25: #{tpu_custom_call.1} parent=5 // pred_check
        _
      $region26: #{tpu_custom_call.1} parent=5 // pred_check_branch
        %156 = sbr.rel (%p153) target = $region28
      $region27: #{tpu_custom_call.1} parent=5 // pred_region
        %s157 = ssub.s32 %s15, 1
        // Predicated region
        $region29: #{tpu_custom_call.1} parent=27 // pred_check
          %p158 = pneg %p48
        $region30: #{tpu_custom_call.1} parent=27 // pred_check_branch
          %160 = sbr.rel (%p158) target = $region32
        $region31: #{tpu_custom_call.1} parent=27 // pred_region
          %161 = dma.done [#allocation9], 16
        $region32: #{tpu_custom_call.1} parent=27 // pred_fallthru
          _
        %s162 = sand.u32 %s63, 1
        %s163 = scalar_lea.sflag [#allocation7], %s162
        %s164 = sand.u32 %s63, 1
        %s165 = smul.addr %s164, 8
        %s166 = scalar_lea.vmem [#allocation10], %s165
        // Predicated region
        $region33: #{tpu_custom_call.1} parent=27 // pred_check
          %p167 = pneg %p76
        $region34: #{tpu_custom_call.1} parent=27 // pred_check_branch
          %169 = sbr.rel (%p167) target = $region36
        $region35: #{tpu_custom_call.1} parent=27 // pred_region
          %170 = dma.done %s163, 128
        $region36: #{tpu_custom_call.1} parent=27 // pred_fallthru
          _
        %171 = sfence
        %p172 = pneg %p48
        %p173 = pneg %p45
        %s174 = sand.u32 %s63, 1
        %s175 = scalar_lea.sflag [#allocation7], %s174
        %s176 = sand.u32 %s63, 1
        %s177 = smul.addr %s176, 8
        %s178 = scalar_lea.vmem [#allocation10], %s177
        %p179 = pneg %p76
        %p180 = pneg %p73
        %p181 = pneg %p102
        %p182 = pneg %p99
        %s183 = sand.u32 %s89, 1
        %s184 = scalar_lea.sflag [#allocation8], %s183
        %s185 = sand.u32 %s89, 1
        %s186 = smul.addr %s185, 16
        %s187 = scalar_lea.vmem [#allocation11], %s186
        %p188 = scmp.eq.s32.totalorder %s25, 0
        // Predicated region
        $region37: #{tpu_custom_call.1} parent=27 // pred_check
          %p189 = pneg %p188
        $region38: #{tpu_custom_call.1} parent=27 // pred_check_branch
          %191 = sbr.rel (%p189) target = $region40
        $region39: #{tpu_custom_call.1} parent=27 // pred_region
          %v192 = vlaneseq
          %vm193 = vcmp.ge.s32.totalorder %v192, 0
          %vm194 = vcmp.lt.s32.totalorder %v192, 256
          %vm195 = vmand %vm193, %vm194
          %196 = vst.msk [vmem:[#allocation2] sm:$0x3] %vm195, 0.0
          %197 = vst.msk [vmem:[#allocation3] sm:$0x3] %vm195, -inf
        $region40: #{tpu_custom_call.1} parent=27 // pred_fallthru
          _
        %v198 = vld [vmem:[%s166] sm:$0xff]
        %v199 = vld [vmem:[#allocation2] sm:$0x3]
        %v201 = vcombine.high %v198, %v198
        %vm203 = vcmask 1043456
        %v204 = vsel %vm203, %v198, 0.0
        %v205 = vrot.slane %v204, 4
        %v206 = vadd.f32 %v204, %v205
        %v207 = vrot.slane %v206, 2
        %v208 = vadd.f32 %v206, %v207
        %v209 = vrot.slane %v208, 1
        %v210 = vadd.f32 %v208, %v209
        %v211 = vsel %vm203, %v201, 0.0
        %v212 = vrot.slane %v211, 4
        %v213 = vadd.f32 %v211, %v212
        %v214 = vrot.slane %v213, 2
        %v215 = vadd.f32 %v213, %v214
        %v216 = vrot.slane %v215, 1
        %v217 = vadd.f32 %v215, %v216
        %v220 = vcombine.low %v210, %v217
        %v222 = vunpack.c.l.s4 1966171168
        %v223 = vunpack.c.0.s8 %v222
        %v224 = vlaneseq
        %v225 = vshrl.u32 %v224, 7
        %v226 = vsub.s32 %v223, %v225
        %v227 = vrot.slane %v220, %v226
        %v229 = vunpack.c.l.s4 1966171168
        %v230 = vunpack.c.0.s8 %v229
        %v231 = vlaneseq
        %v232 = vshrl.u32 %v231, 7
        %v233 = vsub.s32 %v230, %v232
        %v234 = vrot.slane %v227, %v233
        %v236 = vadd.f32 %v199, %v234
        %v237 = vlaneseq
        %vm238 = vcmp.ge.s32.totalorder %v237, 0
        %vm239 = vcmp.lt.s32.totalorder %v237, 256
        %vm240 = vmand %vm238, %vm239
        %241 = vst.msk [vmem:[#allocation2] sm:$0x3] %vm240, %v236
        %v242 = vld [vmem:[#allocation3] sm:$0x3]
        %v243 = vsel %vm203, %v198, -inf
        %v244 = vrot.slane %v243, 4
        %v245 = vmax.f32 %v243, %v244
        %v246 = vrot.slane %v245, 2
        %v247 = vmax.f32 %v245, %v246
        %v248 = vrot.slane %v247, 1
        %v249 = vmax.f32 %v247, %v248
        %v250 = vsel %vm203, %v201, -inf
        %v251 = vrot.slane %v250, 4
        %v252 = vmax.f32 %v250, %v251
        %v253 = vrot.slane %v252, 2
        %v254 = vmax.f32 %v252, %v253
        %v255 = vrot.slane %v254, 1
        %v256 = vmax.f32 %v254, %v255
        %v259 = vcombine.low %v249, %v256
        %v261 = vunpack.c.l.s4 1966171168
        %v262 = vunpack.c.0.s8 %v261
        %v263 = vlaneseq
        %v264 = vshrl.u32 %v263, 7
        %v265 = vsub.s32 %v262, %v264
        %v266 = vrot.slane %v259, %v265
        %v268 = vunpack.c.l.s4 1966171168
        %v269 = vunpack.c.0.s8 %v268
        %v270 = vlaneseq
        %v271 = vshrl.u32 %v270, 7
        %v272 = vsub.s32 %v269, %v271
        %v273 = vrot.slane %v266, %v272
        %v275 = vmax.f32 %v242, %v273
        %276 = vst.msk [vmem:[#allocation3] sm:$0x3] %vm240, %v275
        // Predicated region
        $region41: #{tpu_custom_call.1} parent=27 // pred_check
          %p277 = pneg %p188
        $region42: #{tpu_custom_call.1} parent=27 // pred_check_branch
          %279 = sbr.rel (%p277) target = $region44
        $region43: #{tpu_custom_call.1} parent=27 // pred_region
          %v280 = vld [vmem:[#allocation2] sm:$0x3]
          %v281 = vmul.f32 %v280, 0.25
          %v282 = vld [vmem:[#allocation3] sm:$0x3]
          %vm283 = vcmask 179200
          %284 = vst.msk [vmem:[#allocation4] sm:$0xff] %vm283, 0.0
          %285 = vst.msk [vmem:[#allocation4 + $0x8] sm:$0xff] %vm283, 0.0
          %vm286 = vcmask 177152
          %287 = vst.msk [vmem:[#allocation4 + $0x10] sm:$0x3f] %vm286, 0.0
          %288 = vst.msk [vmem:[#allocation5] sm:$0xff] %vm283, 0.0
          %289 = vst.msk [vmem:[#allocation5 + $0x8] sm:$0xff] %vm283, 0.0
          %290 = vst.msk [vmem:[#allocation5 + $0x10] sm:$0x3f] %vm286, 0.0
          %v292 = vlaneseq
          %v293 = vshrl.u32 %v292, 7
          %v294 = vsub.s32 0, %v293
          %v295 = vrot.slane %v281, %v294
          %296 = vrot.lane.b32.xlu0 %v295, 3
          %v297 = vpop.permute.xlu0 %296
          %vm299 = vcmask 147480
          %300 = vst.msk [vmem:[#allocation4 + $0x3] sm:$0x1] %vm299, %v297
          %v302 = vlaneseq
          %v303 = vshrl.u32 %v302, 7
          %v304 = vsub.s32 0, %v303
          %v305 = vrot.slane %v282, %v304
          %306 = vrot.lane.b32.xlu0 %v305, 3
          %v307 = vpop.permute.xlu0 %306
          %309 = vst.msk [vmem:[#allocation5 + $0x3] sm:$0x1] %vm299, %v307
          %310 = vrot.lane.b32.xlu0 %v295, 115
          %v311 = vpop.permute.xlu0 %310
          %313 = vst.msk [vmem:[#allocation4 + $0x4] sm:$0x1] %vm299, %v311
          %314 = vrot.lane.b32.xlu0 %v305, 115
          %v315 = vpop.permute.xlu0 %314
          %317 = vst.msk [vmem:[#allocation5 + $0x4] sm:$0x1] %vm299, %v315
          %318 = vrot.lane.b32.xlu0 %v295, 99
          %v319 = vpop.permute.xlu0 %318
          %321 = vst.msk [vmem:[#allocation4 + $0x5] sm:$0x1] %vm299, %v319
          %322 = vrot.lane.b32.xlu0 %v305, 99
          %v323 = vpop.permute.xlu0 %322
          %325 = vst.msk [vmem:[#allocation5 + $0x5] sm:$0x1] %vm299, %v323
          %326 = vrot.lane.b32.xlu0 %v295, 83
          %v327 = vpop.permute.xlu0 %326
          %329 = vst.msk [vmem:[#allocation4 + $0x6] sm:$0x1] %vm299, %v327
          %330 = vrot.lane.b32.xlu0 %v305, 83
          %v331 = vpop.permute.xlu0 %330
          %333 = vst.msk [vmem:[#allocation5 + $0x6] sm:$0x1] %vm299, %v331
          %334 = vrot.lane.b32.xlu0 %v295, 67
          %v335 = vpop.permute.xlu0 %334
          %337 = vst.msk [vmem:[#allocation4 + $0x7] sm:$0x1] %vm299, %v335
          %338 = vrot.lane.b32.xlu0 %v305, 67
          %v339 = vpop.permute.xlu0 %338
          %341 = vst.msk [vmem:[#allocation5 + $0x7] sm:$0x1] %vm299, %v339
          %342 = vrot.lane.b32.xlu0 %v295, 51
          %v343 = vpop.permute.xlu0 %342
          %345 = vst.msk [vmem:[#allocation4 + $0x8] sm:$0x1] %vm299, %v343
          %346 = vrot.lane.b32.xlu0 %v305, 51
          %v347 = vpop.permute.xlu0 %346
          %349 = vst.msk [vmem:[#allocation5 + $0x8] sm:$0x1] %vm299, %v347
          %350 = vrot.lane.b32.xlu0 %v295, 35
          %v351 = vpop.permute.xlu0 %350
          %353 = vst.msk [vmem:[#allocation4 + $0x9] sm:$0x1] %vm299, %v351
          %354 = vrot.lane.b32.xlu0 %v305, 35
          %v355 = vpop.permute.xlu0 %354
          %357 = vst.msk [vmem:[#allocation5 + $0x9] sm:$0x1] %vm299, %v355
          %358 = vrot.lane.b32.xlu0 %v295, 19
          %v359 = vpop.permute.xlu0 %358
          %361 = vst.msk [vmem:[#allocation4 + $0xa] sm:$0x1] %vm299, %v359
          %362 = vrot.lane.b32.xlu0 %v305, 19
          %v363 = vpop.permute.xlu0 %362
          %365 = vst.msk [vmem:[#allocation5 + $0xa] sm:$0x1] %vm299, %v363
          %v366 = vlaneseq
          %v367 = vshrl.u32 %v366, 7
          %v368 = vsub.s32 1, %v367
          %v369 = vrot.slane %v281, %v368
          %370 = vrot.lane.b32.xlu0 %v369, 3
          %v371 = vpop.permute.xlu0 %370
          %373 = vst.msk [vmem:[#allocation4 + $0xb] sm:$0x1] %vm299, %v371
          %v374 = vlaneseq
          %v375 = vshrl.u32 %v374, 7
          %v376 = vsub.s32 1, %v375
          %v377 = vrot.slane %v282, %v376
          %378 = vrot.lane.b32.xlu0 %v377, 3
          %v379 = vpop.permute.xlu0 %378
          %381 = vst.msk [vmem:[#allocation5 + $0xb] sm:$0x1] %vm299, %v379
          %382 = vrot.lane.b32.xlu0 %v369, 115
          %v383 = vpop.permute.xlu0 %382
          %385 = vst.msk [vmem:[#allocation4 + $0xc] sm:$0x1] %vm299, %v383
          %386 = vrot.lane.b32.xlu0 %v377, 115
          %v387 = vpop.permute.xlu0 %386
          %389 = vst.msk [vmem:[#allocation5 + $0xc] sm:$0x1] %vm299, %v387
          %390 = vrot.lane.b32.xlu0 %v369, 99
          %v391 = vpop.permute.xlu0 %390
          %393 = vst.msk [vmem:[#allocation4 + $0xd] sm:$0x1] %vm299, %v391
          %394 = vrot.lane.b32.xlu0 %v377, 99
          %v395 = vpop.permute.xlu0 %394
          %397 = vst.msk [vmem:[#allocation5 + $0xd] sm:$0x1] %vm299, %v395
          %398 = vrot.lane.b32.xlu0 %v369, 83
          %v399 = vpop.permute.xlu0 %398
          %401 = vst.msk [vmem:[#allocation4 + $0xe] sm:$0x1] %vm299, %v399
          %402 = vrot.lane.b32.xlu0 %v377, 83
          %v403 = vpop.permute.xlu0 %402
          %405 = vst.msk [vmem:[#allocation5 + $0xe] sm:$0x1] %vm299, %v403
          %406 = vrot.lane.b32.xlu0 %v369, 67
          %v407 = vpop.permute.xlu0 %406
          %409 = vst.msk [vmem:[#allocation4 + $0xf] sm:$0x1] %vm299, %v407
          %410 = vrot.lane.b32.xlu0 %v377, 67
          %v411 = vpop.permute.xlu0 %410
          %413 = vst.msk [vmem:[#allocation5 + $0xf] sm:$0x1] %vm299, %v411
          %414 = vrot.lane.b32.xlu0 %v369, 51
          %v415 = vpop.permute.xlu0 %414
          %417 = vst.msk [vmem:[#allocation4 + $0x10] sm:$0x1] %vm299, %v415
          %418 = vrot.lane.b32.xlu0 %v377, 51
          %v419 = vpop.permute.xlu0 %418
          %421 = vst.msk [vmem:[#allocation5 + $0x10] sm:$0x1] %vm299, %v419
          %422 = vrot.lane.b32.xlu0 %v369, 35
          %v423 = vpop.permute.xlu0 %422
          %425 = vst.msk [vmem:[#allocation4 + $0x11] sm:$0x1] %vm299, %v423
          %426 = vrot.lane.b32.xlu0 %v377, 35
          %v427 = vpop.permute.xlu0 %426
          %429 = vst.msk [vmem:[#allocation5 + $0x11] sm:$0x1] %vm299, %v427
          %430 = vrot.lane.b32.xlu0 %v369, 19
          %v431 = vpop.permute.xlu0 %430
          %433 = vst.msk [vmem:[#allocation4 + $0x12] sm:$0x1] %vm299, %v431
          %434 = vrot.lane.b32.xlu0 %v377, 19
          %v435 = vpop.permute.xlu0 %434
          %437 = vst.msk [vmem:[#allocation5 + $0x12] sm:$0x1] %vm299, %v435
          %v438 = vld [vmem:[#allocation4] sm:$0xff]
          %v439 = vld [vmem:[#allocation4 + $0x8] sm:$0xff]
          %v440 = vld [vmem:[#allocation4 + $0x10] sm:$0x3f]
          %v441 = vld [vmem:[#allocation5] sm:$0xff]
          %v442 = vld [vmem:[#allocation5 + $0x8] sm:$0xff]
          %v443 = vld [vmem:[#allocation5 + $0x10] sm:$0x3f]
          %s444 = sld [smem:[#allocation6]]
          %s445 = sld [smem:[#allocation6 + $0x1]]
          %s446 = sld [smem:[#allocation6 + $0x2]]
          %s447 = sld [smem:[#allocation6 + $0x3]]
          %s448 = sld [smem:[#allocation6 + $0x4]]
          %s449 = sld [smem:[#allocation6 + $0x5]]
          %s450 = sld [smem:[#allocation6 + $0x6]]
          %s451 = sld [smem:[#allocation6 + $0x7]]
          %s452 = sld [smem:[#allocation6 + $0x8]]
          %s453 = sld [smem:[#allocation6 + $0x9]]
          %s454 = sld [smem:[#allocation6 + $0xa]]
          %s455 = sld [smem:[#allocation6 + $0xb]]
          %s456 = sld [smem:[#allocation6 + $0xc]]
          %s457 = sld [smem:[#allocation6 + $0xd]]
          %s458 = sld [smem:[#allocation6 + $0xe]]
          %s459 = sld [smem:[#allocation6 + $0xf]]
          %s460 = sld [smem:[#allocation6 + $0x10]]
          %s461 = sld [smem:[#allocation6 + $0x11]]
          %s462 = sld [smem:[#allocation6 + $0x12]]
          %s463 = sld [smem:[#allocation6 + $0x13]]
          %s464 = sld [smem:[#allocation6 + $0x14]]
          %s465 = sld [smem:[#allocation6 + $0x15]]
          %s466 = sld [smem:[#allocation6 + $0x16]]
          %s467 = sld [smem:[#allocation6 + $0x17]]
          %s468 = sld [smem:[#allocation6 + $0x18]]
          %s469 = sld [smem:[#allocation6 + $0x19]]
          %s470 = sld [smem:[#allocation6 + $0x1a]]
          %s471 = sld [smem:[#allocation6 + $0x1b]]
          %s472 = sld [smem:[#allocation6 + $0x1c]]
          %s473 = sld [smem:[#allocation6 + $0x1d]]
          %s474 = sld [smem:[#allocation6 + $0x1e]]
          %s475 = sld [smem:[#allocation6 + $0x1f]]
          %s476 = sld [smem:[#allocation6 + $0x20]]
          %s477 = sld [smem:[#allocation6 + $0x21]]
          %s478 = sld [smem:[#allocation6 + $0x22]]
          %s479 = sld [smem:[#allocation6 + $0x23]]
          %s480 = sld [smem:[#allocation6 + $0x24]]
          %s481 = sld [smem:[#allocation6 + $0x25]]
          %s482 = sld [smem:[#allocation6 + $0x26]]
          %s483 = sld [smem:[#allocation6 + $0x27]]
          %s484 = sld [smem:[#allocation6 + $0x28]]
          %s485 = sld [smem:[#allocation6 + $0x29]]
          %s486 = sld [smem:[#allocation6 + $0x2a]]
          %s487 = sld [smem:[#allocation6 + $0x2b]]
          %s488 = sld [smem:[#allocation6 + $0x2c]]
          %s489 = sld [smem:[#allocation6 + $0x2d]]
          %s490 = sld [smem:[#allocation6 + $0x2e]]
          %s491 = sld [smem:[#allocation6 + $0x2f]]
          %s492 = sld [smem:[#allocation6 + $0x30]]
          %s493 = sld [smem:[#allocation6 + $0x31]]
          %s494 = sld [smem:[#allocation6 + $0x32]]
          %s495 = sld [smem:[#allocation6 + $0x33]]
          %s496 = sld [smem:[#allocation6 + $0x34]]
          %s497 = sld [smem:[#allocation6 + $0x35]]
          %s498 = sld [smem:[#allocation6 + $0x36]]
          %s499 = sld [smem:[#allocation6 + $0x37]]
          %s500 = sld [smem:[#allocation6 + $0x38]]
          %s501 = sld [smem:[#allocation6 + $0x39]]
          %s502 = sld [smem:[#allocation6 + $0x3a]]
          %s503 = sld [smem:[#allocation6 + $0x3b]]
          %s504 = sld [smem:[#allocation6 + $0x3c]]
          %s505 = sld [smem:[#allocation6 + $0x3d]]
          %s506 = sld [smem:[#allocation6 + $0x3e]]
          %s507 = sld [smem:[#allocation6 + $0x3f]]
          %s508 = sld [smem:[#allocation6 + $0x40]]
          %s509 = sld [smem:[#allocation6 + $0x41]]
          %s510 = sld [smem:[#allocation6 + $0x42]]
          %s511 = sld [smem:[#allocation6 + $0x43]]
          %s512 = sld [smem:[#allocation6 + $0x44]]
          %s513 = sld [smem:[#allocation6 + $0x45]]
          %s514 = sld [smem:[#allocation6 + $0x46]]
          %s515 = sld [smem:[#allocation6 + $0x47]]
          %s516 = sld [smem:[#allocation6 + $0x48]]
          %s517 = sld [smem:[#allocation6 + $0x49]]
          %s518 = sld [smem:[#allocation6 + $0x4a]]
          %s519 = sld [smem:[#allocation6 + $0x4b]]
          %s520 = sld [smem:[#allocation6 + $0x4c]]
          %s521 = sld [smem:[#allocation6 + $0x4d]]
          %s522 = sld [smem:[#allocation6 + $0x4e]]
          %s523 = sld [smem:[#allocation6 + $0x4f]]
          %s524 = sld [smem:[#allocation6 + $0x50]]
          %s525 = sld [smem:[#allocation6 + $0x51]]
          %s526 = sld [smem:[#allocation6 + $0x52]]
          %s527 = sld [smem:[#allocation6 + $0x53]]
          %s528 = sld [smem:[#allocation6 + $0x54]]
          %s529 = sld [smem:[#allocation6 + $0x55]]
          %s530 = sld [smem:[#allocation6 + $0x56]]
          %s531 = sld [smem:[#allocation6 + $0x57]]
          %s532 = sld [smem:[#allocation6 + $0x58]]
          %s533 = sld [smem:[#allocation6 + $0x59]]
          %s534 = sld [smem:[#allocation6 + $0x5a]]
          %s535 = sld [smem:[#allocation6 + $0x5b]]
          %s536 = sld [smem:[#allocation6 + $0x5c]]
          %s537 = sld [smem:[#allocation6 + $0x5d]]
          %s538 = sld [smem:[#allocation6 + $0x5e]]
          %s539 = sld [smem:[#allocation6 + $0x5f]]
          %s540 = sld [smem:[#allocation6 + $0x60]]
          %s541 = sld [smem:[#allocation6 + $0x61]]
          %v542 = vstv %s444
          %v543 = vmul.f32 %v542, %v438
          %v544 = vmul.f32 %v542, %v439
          %v545 = vstv %s493
          %v546 = vmul.f32 %v545, %v441
          %v547 = vmul.f32 %v545, %v442
          %v548 = vadd.f32 %v543, %v546
          %v549 = vadd.f32 %v544, %v547
          %v550 = vstv %s445
          %v551 = vmul.f32 %v550, %v438
          %v552 = vmul.f32 %v550, %v439
          %v553 = vstv %s494
          %v554 = vmul.f32 %v553, %v441
          %v555 = vmul.f32 %v553, %v442
          %v556 = vadd.f32 %v551, %v554
          %v557 = vadd.f32 %v552, %v555
          %v558 = vstv %s446
          %v559 = vmul.f32 %v558, %v438
          %v560 = vmul.f32 %v558, %v439
          %v561 = vstv %s495
          %v562 = vmul.f32 %v561, %v441
          %v563 = vmul.f32 %v561, %v442
          %v564 = vadd.f32 %v559, %v562
          %v565 = vadd.f32 %v560, %v563
          %v566 = vstv %s447
          %v567 = vmul.f32 %v566, %v438
          %v568 = vmul.f32 %v566, %v439
          %v569 = vstv %s496
          %v570 = vmul.f32 %v569, %v441
          %v571 = vmul.f32 %v569, %v442
          %v572 = vadd.f32 %v567, %v570
          %v573 = vadd.f32 %v568, %v571
          %v574 = vstv %s448
          %v575 = vmul.f32 %v574, %v438
          %v576 = vmul.f32 %v574, %v439
          %v577 = vstv %s497
          %v578 = vmul.f32 %v577, %v441
          %v579 = vmul.f32 %v577, %v442
          %v580 = vadd.f32 %v575, %v578
          %v581 = vadd.f32 %v576, %v579
          %v582 = vstv %s449
          %v583 = vmul.f32 %v582, %v438
          %v584 = vmul.f32 %v582, %v439
          %v585 = vstv %s498
          %v586 = vmul.f32 %v585, %v441
          %v587 = vmul.f32 %v585, %v442
          %v588 = vadd.f32 %v583, %v586
          %v589 = vadd.f32 %v584, %v587
          %v590 = vstv %s450
          %v591 = vmul.f32 %v590, %v438
          %v592 = vmul.f32 %v590, %v439
          %v593 = vstv %s499
          %v594 = vmul.f32 %v593, %v441
          %v595 = vmul.f32 %v593, %v442
          %v596 = vadd.f32 %v591, %v594
          %v597 = vadd.f32 %v592, %v595
          %600 = vrot.lane.b32.xlu0 %v556, 127
          %v601 = vpop.permute.xlu0 %600
          %602 = vrot.lane.b32.xlu0 %v557, 127
          %v603 = vpop.permute.xlu0 %602
          %v606 = vadd.f32 %v548, %v601
          %v607 = vadd.f32 %v549, %v603
          %610 = vrot.lane.b32.xlu0 %v572, 127
          %v611 = vpop.permute.xlu0 %610
          %612 = vrot.lane.b32.xlu0 %v573, 127
          %v613 = vpop.permute.xlu0 %612
          %v616 = vadd.f32 %v564, %v611
          %v617 = vadd.f32 %v565, %v613
          %620 = vrot.lane.b32.xlu0 %v616, 126
          %v621 = vpop.permute.xlu0 %620
          %622 = vrot.lane.b32.xlu0 %v617, 126
          %v623 = vpop.permute.xlu0 %622
          %v626 = vadd.f32 %v606, %v621
          %v627 = vadd.f32 %v607, %v623
          %630 = vrot.lane.b32.xlu0 %v588, 127
          %v631 = vpop.permute.xlu0 %630
          %632 = vrot.lane.b32.xlu0 %v589, 127
          %v633 = vpop.permute.xlu0 %632
          %v636 = vadd.f32 %v580, %v631
          %v637 = vadd.f32 %v581, %v633
          %640 = vrot.lane.b32.xlu0 %v596, 126
          %v641 = vpop.permute.xlu0 %640
          %642 = vrot.lane.b32.xlu0 %v597, 126
          %v643 = vpop.permute.xlu0 %642
          %v646 = vadd.f32 %v636, %v641
          %v647 = vadd.f32 %v637, %v643
          %650 = vrot.lane.b32.xlu0 %v646, 124
          %v651 = vpop.permute.xlu0 %650
          %652 = vrot.lane.b32.xlu0 %v647, 124
          %v653 = vpop.permute.xlu0 %652
          %v656 = vadd.f32 %v626, %v651
          %v657 = vadd.f32 %v627, %v653
          %v658 = vadd.f32 %v656, 0.0
          %v659 = vadd.f32 %v657, 0.0
          %v660 = vstv %s451
          %v661 = vmul.f32 %v660, %v438
          %v662 = vmul.f32 %v660, %v439
          %v663 = vmul.f32 %v660, %v440
          %v664 = vstv %s500
          %v665 = vmul.f32 %v664, %v441
          %v666 = vmul.f32 %v664, %v442
          %v667 = vmul.f32 %v664, %v443
          %v668 = vadd.f32 %v661, %v665
          %v669 = vadd.f32 %v662, %v666
          %v670 = vadd.f32 %v663, %v667
          %v671 = vstv %s452
          %v672 = vmul.f32 %v671, %v438
          %v673 = vmul.f32 %v671, %v439
          %v674 = vmul.f32 %v671, %v440
          %v675 = vstv %s501
          %v676 = vmul.f32 %v675, %v441
          %v677 = vmul.f32 %v675, %v442
          %v678 = vmul.f32 %v675, %v443
          %v679 = vadd.f32 %v672, %v676
          %v680 = vadd.f32 %v673, %v677
          %v681 = vadd.f32 %v674, %v678
          %v682 = vstv %s453
          %v683 = vmul.f32 %v682, %v438
          %v684 = vmul.f32 %v682, %v439
          %v685 = vmul.f32 %v682, %v440
          %v686 = vstv %s502
          %v687 = vmul.f32 %v686, %v441
          %v688 = vmul.f32 %v686, %v442
          %v689 = vmul.f32 %v686, %v443
          %v690 = vadd.f32 %v683, %v687
          %v691 = vadd.f32 %v684, %v688
          %v692 = vadd.f32 %v685, %v689
          %v693 = vstv %s454
          %v694 = vmul.f32 %v693, %v438
          %v695 = vmul.f32 %v693, %v439
          %v696 = vmul.f32 %v693, %v440
          %v697 = vstv %s503
          %v698 = vmul.f32 %v697, %v441
          %v699 = vmul.f32 %v697, %v442
          %v700 = vmul.f32 %v697, %v443
          %v701 = vadd.f32 %v694, %v698
          %v702 = vadd.f32 %v695, %v699
          %v703 = vadd.f32 %v696, %v700
          %v704 = vstv %s455
          %v705 = vmul.f32 %v704, %v438
          %v706 = vmul.f32 %v704, %v439
          %v707 = vmul.f32 %v704, %v440
          %v708 = vstv %s504
          %v709 = vmul.f32 %v708, %v441
          %v710 = vmul.f32 %v708, %v442
          %v711 = vmul.f32 %v708, %v443
          %v712 = vadd.f32 %v705, %v709
          %v713 = vadd.f32 %v706, %v710
          %v714 = vadd.f32 %v707, %v711
          %v715 = vstv %s456
          %v716 = vmul.f32 %v715, %v438
          %v717 = vmul.f32 %v715, %v439
          %v718 = vmul.f32 %v715, %v440
          %v719 = vstv %s505
          %v720 = vmul.f32 %v719, %v441
          %v721 = vmul.f32 %v719, %v442
          %v722 = vmul.f32 %v719, %v443
          %v723 = vadd.f32 %v716, %v720
          %v724 = vadd.f32 %v717, %v721
          %v725 = vadd.f32 %v718, %v722
          %v726 = vstv %s457
          %v727 = vmul.f32 %v726, %v438
          %v728 = vmul.f32 %v726, %v439
          %v729 = vmul.f32 %v726, %v440
          %v730 = vstv %s506
          %v731 = vmul.f32 %v730, %v441
          %v732 = vmul.f32 %v730, %v442
          %v733 = vmul.f32 %v730, %v443
          %v734 = vadd.f32 %v727, %v731
          %v735 = vadd.f32 %v728, %v732
          %v736 = vadd.f32 %v729, %v733
          %740 = vrot.lane.b32.xlu0 %v679, 127
          %v741 = vpop.permute.xlu0 %740
          %742 = vrot.lane.b32.xlu0 %v680, 127
          %v743 = vpop.permute.xlu0 %742
          %744 = vrot.lane.b32.xlu0 %v681, 127
          %v745 = vpop.permute.xlu0 %744
          %v749 = vadd.f32 %v668, %v741
          %v750 = vadd.f32 %v669, %v743
          %v751 = vadd.f32 %v670, %v745
          %755 = vrot.lane.b32.xlu0 %v701, 127
          %v756 = vpop.permute.xlu0 %755
          %757 = vrot.lane.b32.xlu0 %v702, 127
          %v758 = vpop.permute.xlu0 %757
          %759 = vrot.lane.b32.xlu0 %v703, 127
          %v760 = vpop.permute.xlu0 %759
          %v764 = vadd.f32 %v690, %v756
          %v765 = vadd.f32 %v691, %v758
          %v766 = vadd.f32 %v692, %v760
          %770 = vrot.lane.b32.xlu0 %v764, 126
          %v771 = vpop.permute.xlu0 %770
          %772 = vrot.lane.b32.xlu0 %v765, 126
          %v773 = vpop.permute.xlu0 %772
          %774 = vrot.lane.b32.xlu0 %v766, 126
          %v775 = vpop.permute.xlu0 %774
          %v779 = vadd.f32 %v749, %v771
          %v780 = vadd.f32 %v750, %v773
          %v781 = vadd.f32 %v751, %v775
          %785 = vrot.lane.b32.xlu0 %v723, 127
          %v786 = vpop.permute.xlu0 %785
          %787 = vrot.lane.b32.xlu0 %v724, 127
          %v788 = vpop.permute.xlu0 %787
          %789 = vrot.lane.b32.xlu0 %v725, 127
          %v790 = vpop.permute.xlu0 %789
          %v794 = vadd.f32 %v712, %v786
          %v795 = vadd.f32 %v713, %v788
          %v796 = vadd.f32 %v714, %v790
          %800 = vrot.lane.b32.xlu0 %v734, 126
          %v801 = vpop.permute.xlu0 %800
          %802 = vrot.lane.b32.xlu0 %v735, 126
          %v803 = vpop.permute.xlu0 %802
          %804 = vrot.lane.b32.xlu0 %v736, 126
          %v805 = vpop.permute.xlu0 %804
          %v809 = vadd.f32 %v794, %v801
          %v810 = vadd.f32 %v795, %v803
          %v811 = vadd.f32 %v796, %v805
          %815 = vrot.lane.b32.xlu0 %v809, 124
          %v816 = vpop.permute.xlu0 %815
          %817 = vrot.lane.b32.xlu0 %v810, 124
          %v818 = vpop.permute.xlu0 %817
          %819 = vrot.lane.b32.xlu0 %v811, 124
          %v820 = vpop.permute.xlu0 %819
          %v824 = vadd.f32 %v779, %v816
          %v825 = vadd.f32 %v780, %v818
          %v826 = vadd.f32 %v781, %v820
          %vm830 = vcmask 1046528
          %v831 = vrot.slane %v824, 1
          %v832 = vrot.slane %v825, 1
          %v833 = vsel %vm830, %v831, %v832
          %v834 = vrot.slane %v826, 1
          %v835 = vsel %vm830, %v832, %v834
          %v838 = vadd.f32 %v658, %v833
          %v839 = vadd.f32 %v659, %v835
          %v840 = vstv %s458
          %v841 = vmul.f32 %v840, %v438
          %v842 = vmul.f32 %v840, %v439
          %v843 = vmul.f32 %v840, %v440
          %v844 = vstv %s507
          %v845 = vmul.f32 %v844, %v441
          %v846 = vmul.f32 %v844, %v442
          %v847 = vmul.f32 %v844, %v443
          %v848 = vadd.f32 %v841, %v845
          %v849 = vadd.f32 %v842, %v846
          %v850 = vadd.f32 %v843, %v847
          %v851 = vstv %s459
          %v852 = vmul.f32 %v851, %v438
          %v853 = vmul.f32 %v851, %v439
          %v854 = vmul.f32 %v851, %v440
          %v855 = vstv %s508
          %v856 = vmul.f32 %v855, %v441
          %v857 = vmul.f32 %v855, %v442
          %v858 = vmul.f32 %v855, %v443
          %v859 = vadd.f32 %v852, %v856
          %v860 = vadd.f32 %v853, %v857
          %v861 = vadd.f32 %v854, %v858
          %v862 = vstv %s460
          %v863 = vmul.f32 %v862, %v438
          %v864 = vmul.f32 %v862, %v439
          %v865 = vmul.f32 %v862, %v440
          %v866 = vstv %s509
          %v867 = vmul.f32 %v866, %v441
          %v868 = vmul.f32 %v866, %v442
          %v869 = vmul.f32 %v866, %v443
          %v870 = vadd.f32 %v863, %v867
          %v871 = vadd.f32 %v864, %v868
          %v872 = vadd.f32 %v865, %v869
          %v873 = vstv %s461
          %v874 = vmul.f32 %v873, %v438
          %v875 = vmul.f32 %v873, %v439
          %v876 = vmul.f32 %v873, %v440
          %v877 = vstv %s510
          %v878 = vmul.f32 %v877, %v441
          %v879 = vmul.f32 %v877, %v442
          %v880 = vmul.f32 %v877, %v443
          %v881 = vadd.f32 %v874, %v878
          %v882 = vadd.f32 %v875, %v879
          %v883 = vadd.f32 %v876, %v880
          %v884 = vstv %s462
          %v885 = vmul.f32 %v884, %v438
          %v886 = vmul.f32 %v884, %v439
          %v887 = vmul.f32 %v884, %v440
          %v888 = vstv %s511
          %v889 = vmul.f32 %v888, %v441
          %v890 = vmul.f32 %v888, %v442
          %v891 = vmul.f32 %v888, %v443
          %v892 = vadd.f32 %v885, %v889
          %v893 = vadd.f32 %v886, %v890
          %v894 = vadd.f32 %v887, %v891
          %v895 = vstv %s463
          %v896 = vmul.f32 %v895, %v438
          %v897 = vmul.f32 %v895, %v439
          %v898 = vmul.f32 %v895, %v440
          %v899 = vstv %s512
          %v900 = vmul.f32 %v899, %v441
          %v901 = vmul.f32 %v899, %v442
          %v902 = vmul.f32 %v899, %v443
          %v903 = vadd.f32 %v896, %v900
          %v904 = vadd.f32 %v897, %v901
          %v905 = vadd.f32 %v898, %v902
          %v906 = vstv %s464
          %v907 = vmul.f32 %v906, %v438
          %v908 = vmul.f32 %v906, %v439
          %v909 = vmul.f32 %v906, %v440
          %v910 = vstv %s513
          %v911 = vmul.f32 %v910, %v441
          %v912 = vmul.f32 %v910, %v442
          %v913 = vmul.f32 %v910, %v443
          %v914 = vadd.f32 %v907, %v911
          %v915 = vadd.f32 %v908, %v912
          %v916 = vadd.f32 %v909, %v913
          %920 = vrot.lane.b32.xlu0 %v859, 127
          %v921 = vpop.permute.xlu0 %920
          %922 = vrot.lane.b32.xlu0 %v860, 127
          %v923 = vpop.permute.xlu0 %922
          %924 = vrot.lane.b32.xlu0 %v861, 127
          %v925 = vpop.permute.xlu0 %924
          %v929 = vadd.f32 %v848, %v921
          %v930 = vadd.f32 %v849, %v923
          %v931 = vadd.f32 %v850, %v925
          %935 = vrot.lane.b32.xlu0 %v881, 127
          %v936 = vpop.permute.xlu0 %935
          %937 = vrot.lane.b32.xlu0 %v882, 127
          %v938 = vpop.permute.xlu0 %937
          %939 = vrot.lane.b32.xlu0 %v883, 127
          %v940 = vpop.permute.xlu0 %939
          %v944 = vadd.f32 %v870, %v936
          %v945 = vadd.f32 %v871, %v938
          %v946 = vadd.f32 %v872, %v940
          %950 = vrot.lane.b32.xlu0 %v944, 126
          %v951 = vpop.permute.xlu0 %950
          %952 = vrot.lane.b32.xlu0 %v945, 126
          %v953 = vpop.permute.xlu0 %952
          %954 = vrot.lane.b32.xlu0 %v946, 126
          %v955 = vpop.permute.xlu0 %954
          %v959 = vadd.f32 %v929, %v951
          %v960 = vadd.f32 %v930, %v953
          %v961 = vadd.f32 %v931, %v955
          %965 = vrot.lane.b32.xlu0 %v903, 127
          %v966 = vpop.permute.xlu0 %965
          %967 = vrot.lane.b32.xlu0 %v904, 127
          %v968 = vpop.permute.xlu0 %967
          %969 = vrot.lane.b32.xlu0 %v905, 127
          %v970 = vpop.permute.xlu0 %969
          %v974 = vadd.f32 %v892, %v966
          %v975 = vadd.f32 %v893, %v968
          %v976 = vadd.f32 %v894, %v970
          %980 = vrot.lane.b32.xlu0 %v914, 126
          %v981 = vpop.permute.xlu0 %980
          %982 = vrot.lane.b32.xlu0 %v915, 126
          %v983 = vpop.permute.xlu0 %982
          %984 = vrot.lane.b32.xlu0 %v916, 126
          %v985 = vpop.permute.xlu0 %984
          %v989 = vadd.f32 %v974, %v981
          %v990 = vadd.f32 %v975, %v983
          %v991 = vadd.f32 %v976, %v985
          %995 = vrot.lane.b32.xlu0 %v989, 124
          %v996 = vpop.permute.xlu0 %995
          %997 = vrot.lane.b32.xlu0 %v990, 124
          %v998 = vpop.permute.xlu0 %997
          %999 = vrot.lane.b32.xlu0 %v991, 124
          %v1000 = vpop.permute.xlu0 %999
          %v1004 = vadd.f32 %v959, %v996
          %v1005 = vadd.f32 %v960, %v998
          %v1006 = vadd.f32 %v961, %v1000
          %vm1010 = vcmask 1045504
          %v1011 = vrot.slane %v1004, 2
          %v1012 = vrot.slane %v1005, 2
          %v1013 = vsel %vm1010, %v1011, %v1012
          %v1014 = vrot.slane %v1006, 2
          %v1015 = vsel %vm1010, %v1012, %v1014
          %v1018 = vadd.f32 %v838, %v1013
          %v1019 = vadd.f32 %v839, %v1015
          %v1020 = vstv %s465
          %v1021 = vmul.f32 %v1020, %v438
          %v1022 = vmul.f32 %v1020, %v439
          %v1023 = vmul.f32 %v1020, %v440
          %v1024 = vstv %s514
          %v1025 = vmul.f32 %v1024, %v441
          %v1026 = vmul.f32 %v1024, %v442
          %v1027 = vmul.f32 %v1024, %v443
          %v1028 = vadd.f32 %v1021, %v1025
          %v1029 = vadd.f32 %v1022, %v1026
          %v1030 = vadd.f32 %v1023, %v1027
          %v1031 = vstv %s466
          %v1032 = vmul.f32 %v1031, %v438
          %v1033 = vmul.f32 %v1031, %v439
          %v1034 = vmul.f32 %v1031, %v440
          %v1035 = vstv %s515
          %v1036 = vmul.f32 %v1035, %v441
          %v1037 = vmul.f32 %v1035, %v442
          %v1038 = vmul.f32 %v1035, %v443
          %v1039 = vadd.f32 %v1032, %v1036
          %v1040 = vadd.f32 %v1033, %v1037
          %v1041 = vadd.f32 %v1034, %v1038
          %v1042 = vstv %s467
          %v1043 = vmul.f32 %v1042, %v438
          %v1044 = vmul.f32 %v1042, %v439
          %v1045 = vmul.f32 %v1042, %v440
          %v1046 = vstv %s516
          %v1047 = vmul.f32 %v1046, %v441
          %v1048 = vmul.f32 %v1046, %v442
          %v1049 = vmul.f32 %v1046, %v443
          %v1050 = vadd.f32 %v1043, %v1047
          %v1051 = vadd.f32 %v1044, %v1048
          %v1052 = vadd.f32 %v1045, %v1049
          %v1053 = vstv %s468
          %v1054 = vmul.f32 %v1053, %v438
          %v1055 = vmul.f32 %v1053, %v439
          %v1056 = vmul.f32 %v1053, %v440
          %v1057 = vstv %s517
          %v1058 = vmul.f32 %v1057, %v441
          %v1059 = vmul.f32 %v1057, %v442
          %v1060 = vmul.f32 %v1057, %v443
          %v1061 = vadd.f32 %v1054, %v1058
          %v1062 = vadd.f32 %v1055, %v1059
          %v1063 = vadd.f32 %v1056, %v1060
          %v1064 = vstv %s469
          %v1065 = vmul.f32 %v1064, %v438
          %v1066 = vmul.f32 %v1064, %v439
          %v1067 = vmul.f32 %v1064, %v440
          %v1068 = vstv %s518
          %v1069 = vmul.f32 %v1068, %v441
          %v1070 = vmul.f32 %v1068, %v442
          %v1071 = vmul.f32 %v1068, %v443
          %v1072 = vadd.f32 %v1065, %v1069
          %v1073 = vadd.f32 %v1066, %v1070
          %v1074 = vadd.f32 %v1067, %v1071
          %v1075 = vstv %s470
          %v1076 = vmul.f32 %v1075, %v438
          %v1077 = vmul.f32 %v1075, %v439
          %v1078 = vmul.f32 %v1075, %v440
          %v1079 = vstv %s519
          %v1080 = vmul.f32 %v1079, %v441
          %v1081 = vmul.f32 %v1079, %v442
          %v1082 = vmul.f32 %v1079, %v443
          %v1083 = vadd.f32 %v1076, %v1080
          %v1084 = vadd.f32 %v1077, %v1081
          %v1085 = vadd.f32 %v1078, %v1082
          %v1086 = vstv %s471
          %v1087 = vmul.f32 %v1086, %v438
          %v1088 = vmul.f32 %v1086, %v439
          %v1089 = vmul.f32 %v1086, %v440
          %v1090 = vstv %s520
          %v1091 = vmul.f32 %v1090, %v441
          %v1092 = vmul.f32 %v1090, %v442
          %v1093 = vmul.f32 %v1090, %v443
          %v1094 = vadd.f32 %v1087, %v1091
          %v1095 = vadd.f32 %v1088, %v1092
          %v1096 = vadd.f32 %v1089, %v1093
          %1100 = vrot.lane.b32.xlu0 %v1039, 127
          %v1101 = vpop.permute.xlu0 %1100
          %1102 = vrot.lane.b32.xlu0 %v1040, 127
          %v1103 = vpop.permute.xlu0 %1102
          %1104 = vrot.lane.b32.xlu0 %v1041, 127
          %v1105 = vpop.permute.xlu0 %1104
          %v1109 = vadd.f32 %v1028, %v1101
          %v1110 = vadd.f32 %v1029, %v1103
          %v1111 = vadd.f32 %v1030, %v1105
          %1115 = vrot.lane.b32.xlu0 %v1061, 127
          %v1116 = vpop.permute.xlu0 %1115
          %1117 = vrot.lane.b32.xlu0 %v1062, 127
          %v1118 = vpop.permute.xlu0 %1117
          %1119 = vrot.lane.b32.xlu0 %v1063, 127
          %v1120 = vpop.permute.xlu0 %1119
          %v1124 = vadd.f32 %v1050, %v1116
          %v1125 = vadd.f32 %v1051, %v1118
          %v1126 = vadd.f32 %v1052, %v1120
          %1130 = vrot.lane.b32.xlu0 %v1124, 126
          %v1131 = vpop.permute.xlu0 %1130
          %1132 = vrot.lane.b32.xlu0 %v1125, 126
          %v1133 = vpop.permute.xlu0 %1132
          %1134 = vrot.lane.b32.xlu0 %v1126, 126
          %v1135 = vpop.permute.xlu0 %1134
          %v1139 = vadd.f32 %v1109, %v1131
          %v1140 = vadd.f32 %v1110, %v1133
          %v1141 = vadd.f32 %v1111, %v1135
          %1145 = vrot.lane.b32.xlu0 %v1083, 127
          %v1146 = vpop.permute.xlu0 %1145
          %1147 = vrot.lane.b32.xlu0 %v1084, 127
          %v1148 = vpop.permute.xlu0 %1147
          %1149 = vrot.lane.b32.xlu0 %v1085, 127
          %v1150 = vpop.permute.xlu0 %1149
          %v1154 = vadd.f32 %v1072, %v1146
          %v1155 = vadd.f32 %v1073, %v1148
          %v1156 = vadd.f32 %v1074, %v1150
          %1160 = vrot.lane.b32.xlu0 %v1094, 126
          %v1161 = vpop.permute.xlu0 %1160
          %1162 = vrot.lane.b32.xlu0 %v1095, 126
          %v1163 = vpop.permute.xlu0 %1162
          %1164 = vrot.lane.b32.xlu0 %v1096, 126
          %v1165 = vpop.permute.xlu0 %1164
          %v1169 = vadd.f32 %v1154, %v1161
          %v1170 = vadd.f32 %v1155, %v1163
          %v1171 = vadd.f32 %v1156, %v1165
          %1175 = vrot.lane.b32.xlu0 %v1169, 124
          %v1176 = vpop.permute.xlu0 %1175
          %1177 = vrot.lane.b32.xlu0 %v1170, 124
          %v1178 = vpop.permute.xlu0 %1177
          %1179 = vrot.lane.b32.xlu0 %v1171, 124
          %v1180 = vpop.permute.xlu0 %1179
          %v1184 = vadd.f32 %v1139, %v1176
          %v1185 = vadd.f32 %v1140, %v1178
          %v1186 = vadd.f32 %v1141, %v1180
          %vm1190 = vcmask 1044480
          %v1191 = vrot.slane %v1184, 3
          %v1192 = vrot.slane %v1185, 3
          %v1193 = vsel %vm1190, %v1191, %v1192
          %v1194 = vrot.slane %v1186, 3
          %v1195 = vsel %vm1190, %v1192, %v1194
          %v1198 = vadd.f32 %v1018, %v1193
          %v1199 = vadd.f32 %v1019, %v1195
          %v1200 = vstv %s472
          %v1201 = vmul.f32 %v1200, %v438
          %v1202 = vmul.f32 %v1200, %v439
          %v1203 = vmul.f32 %v1200, %v440
          %v1204 = vstv %s521
          %v1205 = vmul.f32 %v1204, %v441
          %v1206 = vmul.f32 %v1204, %v442
          %v1207 = vmul.f32 %v1204, %v443
          %v1208 = vadd.f32 %v1201, %v1205
          %v1209 = vadd.f32 %v1202, %v1206
          %v1210 = vadd.f32 %v1203, %v1207
          %v1211 = vstv %s473
          %v1212 = vmul.f32 %v1211, %v438
          %v1213 = vmul.f32 %v1211, %v439
          %v1214 = vmul.f32 %v1211, %v440
          %v1215 = vstv %s522
          %v1216 = vmul.f32 %v1215, %v441
          %v1217 = vmul.f32 %v1215, %v442
          %v1218 = vmul.f32 %v1215, %v443
          %v1219 = vadd.f32 %v1212, %v1216
          %v1220 = vadd.f32 %v1213, %v1217
          %v1221 = vadd.f32 %v1214, %v1218
          %v1222 = vstv %s474
          %v1223 = vmul.f32 %v1222, %v438
          %v1224 = vmul.f32 %v1222, %v439
          %v1225 = vmul.f32 %v1222, %v440
          %v1226 = vstv %s523
          %v1227 = vmul.f32 %v1226, %v441
          %v1228 = vmul.f32 %v1226, %v442
          %v1229 = vmul.f32 %v1226, %v443
          %v1230 = vadd.f32 %v1223, %v1227
          %v1231 = vadd.f32 %v1224, %v1228
          %v1232 = vadd.f32 %v1225, %v1229
          %v1233 = vstv %s475
          %v1234 = vmul.f32 %v1233, %v438
          %v1235 = vmul.f32 %v1233, %v439
          %v1236 = vmul.f32 %v1233, %v440
          %v1237 = vstv %s524
          %v1238 = vmul.f32 %v1237, %v441
          %v1239 = vmul.f32 %v1237, %v442
          %v1240 = vmul.f32 %v1237, %v443
          %v1241 = vadd.f32 %v1234, %v1238
          %v1242 = vadd.f32 %v1235, %v1239
          %v1243 = vadd.f32 %v1236, %v1240
          %v1244 = vstv %s476
          %v1245 = vmul.f32 %v1244, %v438
          %v1246 = vmul.f32 %v1244, %v439
          %v1247 = vmul.f32 %v1244, %v440
          %v1248 = vstv %s525
          %v1249 = vmul.f32 %v1248, %v441
          %v1250 = vmul.f32 %v1248, %v442
          %v1251 = vmul.f32 %v1248, %v443
          %v1252 = vadd.f32 %v1245, %v1249
          %v1253 = vadd.f32 %v1246, %v1250
          %v1254 = vadd.f32 %v1247, %v1251
          %v1255 = vstv %s477
          %v1256 = vmul.f32 %v1255, %v438
          %v1257 = vmul.f32 %v1255, %v439
          %v1258 = vmul.f32 %v1255, %v440
          %v1259 = vstv %s526
          %v1260 = vmul.f32 %v1259, %v441
          %v1261 = vmul.f32 %v1259, %v442
          %v1262 = vmul.f32 %v1259, %v443
          %v1263 = vadd.f32 %v1256, %v1260
          %v1264 = vadd.f32 %v1257, %v1261
          %v1265 = vadd.f32 %v1258, %v1262
          %v1266 = vstv %s478
          %v1267 = vmul.f32 %v1266, %v438
          %v1268 = vmul.f32 %v1266, %v439
          %v1269 = vmul.f32 %v1266, %v440
          %v1270 = vstv %s527
          %v1271 = vmul.f32 %v1270, %v441
          %v1272 = vmul.f32 %v1270, %v442
          %v1273 = vmul.f32 %v1270, %v443
          %v1274 = vadd.f32 %v1267, %v1271
          %v1275 = vadd.f32 %v1268, %v1272
          %v1276 = vadd.f32 %v1269, %v1273
          %1280 = vrot.lane.b32.xlu0 %v1219, 127
          %v1281 = vpop.permute.xlu0 %1280
          %1282 = vrot.lane.b32.xlu0 %v1220, 127
          %v1283 = vpop.permute.xlu0 %1282
          %1284 = vrot.lane.b32.xlu0 %v1221, 127
          %v1285 = vpop.permute.xlu0 %1284
          %v1289 = vadd.f32 %v1208, %v1281
          %v1290 = vadd.f32 %v1209, %v1283
          %v1291 = vadd.f32 %v1210, %v1285
          %1295 = vrot.lane.b32.xlu0 %v1241, 127
          %v1296 = vpop.permute.xlu0 %1295
          %1297 = vrot.lane.b32.xlu0 %v1242, 127
          %v1298 = vpop.permute.xlu0 %1297
          %1299 = vrot.lane.b32.xlu0 %v1243, 127
          %v1300 = vpop.permute.xlu0 %1299
          %v1304 = vadd.f32 %v1230, %v1296
          %v1305 = vadd.f32 %v1231, %v1298
          %v1306 = vadd.f32 %v1232, %v1300
          %1310 = vrot.lane.b32.xlu0 %v1304, 126
          %v1311 = vpop.permute.xlu0 %1310
          %1312 = vrot.lane.b32.xlu0 %v1305, 126
          %v1313 = vpop.permute.xlu0 %1312
          %1314 = vrot.lane.b32.xlu0 %v1306, 126
          %v1315 = vpop.permute.xlu0 %1314
          %v1319 = vadd.f32 %v1289, %v1311
          %v1320 = vadd.f32 %v1290, %v1313
          %v1321 = vadd.f32 %v1291, %v1315
          %1325 = vrot.lane.b32.xlu0 %v1263, 127
          %v1326 = vpop.permute.xlu0 %1325
          %1327 = vrot.lane.b32.xlu0 %v1264, 127
          %v1328 = vpop.permute.xlu0 %1327
          %1329 = vrot.lane.b32.xlu0 %v1265, 127
          %v1330 = vpop.permute.xlu0 %1329
          %v1334 = vadd.f32 %v1252, %v1326
          %v1335 = vadd.f32 %v1253, %v1328
          %v1336 = vadd.f32 %v1254, %v1330
          %1340 = vrot.lane.b32.xlu0 %v1274, 126
          %v1341 = vpop.permute.xlu0 %1340
          %1342 = vrot.lane.b32.xlu0 %v1275, 126
          %v1343 = vpop.permute.xlu0 %1342
          %1344 = vrot.lane.b32.xlu0 %v1276, 126
          %v1345 = vpop.permute.xlu0 %1344
          %v1349 = vadd.f32 %v1334, %v1341
          %v1350 = vadd.f32 %v1335, %v1343
          %v1351 = vadd.f32 %v1336, %v1345
          %1355 = vrot.lane.b32.xlu0 %v1349, 124
          %v1356 = vpop.permute.xlu0 %1355
          %1357 = vrot.lane.b32.xlu0 %v1350, 124
          %v1358 = vpop.permute.xlu0 %1357
          %1359 = vrot.lane.b32.xlu0 %v1351, 124
          %v1360 = vpop.permute.xlu0 %1359
          %v1364 = vadd.f32 %v1319, %v1356
          %v1365 = vadd.f32 %v1320, %v1358
          %v1366 = vadd.f32 %v1321, %v1360
          %v1370 = vrot.slane %v1364, 4
          %v1371 = vrot.slane %v1365, 4
          %v1372 = vsel %vm203, %v1370, %v1371
          %v1373 = vrot.slane %v1366, 4
          %v1374 = vsel %vm203, %v1371, %v1373
          %v1377 = vadd.f32 %v1198, %v1372
          %v1378 = vadd.f32 %v1199, %v1374
          %v1379 = vstv %s479
          %v1380 = vmul.f32 %v1379, %v438
          %v1381 = vmul.f32 %v1379, %v439
          %v1382 = vmul.f32 %v1379, %v440
          %v1383 = vstv %s528
          %v1384 = vmul.f32 %v1383, %v441
          %v1385 = vmul.f32 %v1383, %v442
          %v1386 = vmul.f32 %v1383, %v443
          %v1387 = vadd.f32 %v1380, %v1384
          %v1388 = vadd.f32 %v1381, %v1385
          %v1389 = vadd.f32 %v1382, %v1386
          %v1390 = vstv %s480
          %v1391 = vmul.f32 %v1390, %v438
          %v1392 = vmul.f32 %v1390, %v439
          %v1393 = vmul.f32 %v1390, %v440
          %v1394 = vstv %s529
          %v1395 = vmul.f32 %v1394, %v441
          %v1396 = vmul.f32 %v1394, %v442
          %v1397 = vmul.f32 %v1394, %v443
          %v1398 = vadd.f32 %v1391, %v1395
          %v1399 = vadd.f32 %v1392, %v1396
          %v1400 = vadd.f32 %v1393, %v1397
          %v1401 = vstv %s481
          %v1402 = vmul.f32 %v1401, %v438
          %v1403 = vmul.f32 %v1401, %v439
          %v1404 = vmul.f32 %v1401, %v440
          %v1405 = vstv %s530
          %v1406 = vmul.f32 %v1405, %v441
          %v1407 = vmul.f32 %v1405, %v442
          %v1408 = vmul.f32 %v1405, %v443
          %v1409 = vadd.f32 %v1402, %v1406
          %v1410 = vadd.f32 %v1403, %v1407
          %v1411 = vadd.f32 %v1404, %v1408
          %v1412 = vstv %s482
          %v1413 = vmul.f32 %v1412, %v438
          %v1414 = vmul.f32 %v1412, %v439
          %v1415 = vmul.f32 %v1412, %v440
          %v1416 = vstv %s531
          %v1417 = vmul.f32 %v1416, %v441
          %v1418 = vmul.f32 %v1416, %v442
          %v1419 = vmul.f32 %v1416, %v443
          %v1420 = vadd.f32 %v1413, %v1417
          %v1421 = vadd.f32 %v1414, %v1418
          %v1422 = vadd.f32 %v1415, %v1419
          %v1423 = vstv %s483
          %v1424 = vmul.f32 %v1423, %v438
          %v1425 = vmul.f32 %v1423, %v439
          %v1426 = vmul.f32 %v1423, %v440
          %v1427 = vstv %s532
          %v1428 = vmul.f32 %v1427, %v441
          %v1429 = vmul.f32 %v1427, %v442
          %v1430 = vmul.f32 %v1427, %v443
          %v1431 = vadd.f32 %v1424, %v1428
          %v1432 = vadd.f32 %v1425, %v1429
          %v1433 = vadd.f32 %v1426, %v1430
          %v1434 = vstv %s484
          %v1435 = vmul.f32 %v1434, %v438
          %v1436 = vmul.f32 %v1434, %v439
          %v1437 = vmul.f32 %v1434, %v440
          %v1438 = vstv %s533
          %v1439 = vmul.f32 %v1438, %v441
          %v1440 = vmul.f32 %v1438, %v442
          %v1441 = vmul.f32 %v1438, %v443
          %v1442 = vadd.f32 %v1435, %v1439
          %v1443 = vadd.f32 %v1436, %v1440
          %v1444 = vadd.f32 %v1437, %v1441
          %v1445 = vstv %s485
          %v1446 = vmul.f32 %v1445, %v438
          %v1447 = vmul.f32 %v1445, %v439
          %v1448 = vmul.f32 %v1445, %v440
          %v1449 = vstv %s534
          %v1450 = vmul.f32 %v1449, %v441
          %v1451 = vmul.f32 %v1449, %v442
          %v1452 = vmul.f32 %v1449, %v443
          %v1453 = vadd.f32 %v1446, %v1450
          %v1454 = vadd.f32 %v1447, %v1451
          %v1455 = vadd.f32 %v1448, %v1452
          %1459 = vrot.lane.b32.xlu0 %v1398, 127
          %v1460 = vpop.permute.xlu0 %1459
          %1461 = vrot.lane.b32.xlu0 %v1399, 127
          %v1462 = vpop.permute.xlu0 %1461
          %1463 = vrot.lane.b32.xlu0 %v1400, 127
          %v1464 = vpop.permute.xlu0 %1463
          %v1468 = vadd.f32 %v1387, %v1460
          %v1469 = vadd.f32 %v1388, %v1462
          %v1470 = vadd.f32 %v1389, %v1464
          %1474 = vrot.lane.b32.xlu0 %v1420, 127
          %v1475 = vpop.permute.xlu0 %1474
          %1476 = vrot.lane.b32.xlu0 %v1421, 127
          %v1477 = vpop.permute.xlu0 %1476
          %1478 = vrot.lane.b32.xlu0 %v1422, 127
          %v1479 = vpop.permute.xlu0 %1478
          %v1483 = vadd.f32 %v1409, %v1475
          %v1484 = vadd.f32 %v1410, %v1477
          %v1485 = vadd.f32 %v1411, %v1479
          %1489 = vrot.lane.b32.xlu0 %v1483, 126
          %v1490 = vpop.permute.xlu0 %1489
          %1491 = vrot.lane.b32.xlu0 %v1484, 126
          %v1492 = vpop.permute.xlu0 %1491
          %1493 = vrot.lane.b32.xlu0 %v1485, 126
          %v1494 = vpop.permute.xlu0 %1493
          %v1498 = vadd.f32 %v1468, %v1490
          %v1499 = vadd.f32 %v1469, %v1492
          %v1500 = vadd.f32 %v1470, %v1494
          %1504 = vrot.lane.b32.xlu0 %v1442, 127
          %v1505 = vpop.permute.xlu0 %1504
          %1506 = vrot.lane.b32.xlu0 %v1443, 127
          %v1507 = vpop.permute.xlu0 %1506
          %1508 = vrot.lane.b32.xlu0 %v1444, 127
          %v1509 = vpop.permute.xlu0 %1508
          %v1513 = vadd.f32 %v1431, %v1505
          %v1514 = vadd.f32 %v1432, %v1507
          %v1515 = vadd.f32 %v1433, %v1509
          %1519 = vrot.lane.b32.xlu0 %v1453, 126
          %v1520 = vpop.permute.xlu0 %1519
          %1521 = vrot.lane.b32.xlu0 %v1454, 126
          %v1522 = vpop.permute.xlu0 %1521
          %1523 = vrot.lane.b32.xlu0 %v1455, 126
          %v1524 = vpop.permute.xlu0 %1523
          %v1528 = vadd.f32 %v1513, %v1520
          %v1529 = vadd.f32 %v1514, %v1522
          %v1530 = vadd.f32 %v1515, %v1524
          %1534 = vrot.lane.b32.xlu0 %v1528, 124
          %v1535 = vpop.permute.xlu0 %1534
          %1536 = vrot.lane.b32.xlu0 %v1529, 124
          %v1537 = vpop.permute.xlu0 %1536
          %1538 = vrot.lane.b32.xlu0 %v1530, 124
          %v1539 = vpop.permute.xlu0 %1538
          %v1543 = vadd.f32 %v1498, %v1535
          %v1544 = vadd.f32 %v1499, %v1537
          %v1545 = vadd.f32 %v1500, %v1539
          %vm1549 = vcmask 1042432
          %v1550 = vrot.slane %v1543, 5
          %v1551 = vrot.slane %v1544, 5
          %v1552 = vsel %vm1549, %v1550, %v1551
          %v1553 = vrot.slane %v1545, 5
          %v1554 = vsel %vm1549, %v1551, %v1553
          %v1557 = vadd.f32 %v1377, %v1552
          %v1558 = vadd.f32 %v1378, %v1554
          %v1559 = vstv %s486
          %v1560 = vmul.f32 %v1559, %v438
          %v1561 = vmul.f32 %v1559, %v439
          %v1562 = vmul.f32 %v1559, %v440
          %v1563 = vstv %s535
          %v1564 = vmul.f32 %v1563, %v441
          %v1565 = vmul.f32 %v1563, %v442
          %v1566 = vmul.f32 %v1563, %v443
          %v1567 = vadd.f32 %v1560, %v1564
          %v1568 = vadd.f32 %v1561, %v1565
          %v1569 = vadd.f32 %v1562, %v1566
          %v1570 = vstv %s487
          %v1571 = vmul.f32 %v1570, %v438
          %v1572 = vmul.f32 %v1570, %v439
          %v1573 = vmul.f32 %v1570, %v440
          %v1574 = vstv %s536
          %v1575 = vmul.f32 %v1574, %v441
          %v1576 = vmul.f32 %v1574, %v442
          %v1577 = vmul.f32 %v1574, %v443
          %v1578 = vadd.f32 %v1571, %v1575
          %v1579 = vadd.f32 %v1572, %v1576
          %v1580 = vadd.f32 %v1573, %v1577
          %v1581 = vstv %s488
          %v1582 = vmul.f32 %v1581, %v438
          %v1583 = vmul.f32 %v1581, %v439
          %v1584 = vmul.f32 %v1581, %v440
          %v1585 = vstv %s537
          %v1586 = vmul.f32 %v1585, %v441
          %v1587 = vmul.f32 %v1585, %v442
          %v1588 = vmul.f32 %v1585, %v443
          %v1589 = vadd.f32 %v1582, %v1586
          %v1590 = vadd.f32 %v1583, %v1587
          %v1591 = vadd.f32 %v1584, %v1588
          %v1592 = vstv %s489
          %v1593 = vmul.f32 %v1592, %v438
          %v1594 = vmul.f32 %v1592, %v439
          %v1595 = vmul.f32 %v1592, %v440
          %v1596 = vstv %s538
          %v1597 = vmul.f32 %v1596, %v441
          %v1598 = vmul.f32 %v1596, %v442
          %v1599 = vmul.f32 %v1596, %v443
          %v1600 = vadd.f32 %v1593, %v1597
          %v1601 = vadd.f32 %v1594, %v1598
          %v1602 = vadd.f32 %v1595, %v1599
          %v1603 = vstv %s490
          %v1604 = vmul.f32 %v1603, %v438
          %v1605 = vmul.f32 %v1603, %v439
          %v1606 = vmul.f32 %v1603, %v440
          %v1607 = vstv %s539
          %v1608 = vmul.f32 %v1607, %v441
          %v1609 = vmul.f32 %v1607, %v442
          %v1610 = vmul.f32 %v1607, %v443
          %v1611 = vadd.f32 %v1604, %v1608
          %v1612 = vadd.f32 %v1605, %v1609
          %v1613 = vadd.f32 %v1606, %v1610
          %v1614 = vstv %s491
          %v1615 = vmul.f32 %v1614, %v438
          %v1616 = vmul.f32 %v1614, %v439
          %v1617 = vmul.f32 %v1614, %v440
          %v1618 = vstv %s540
          %v1619 = vmul.f32 %v1618, %v441
          %v1620 = vmul.f32 %v1618, %v442
          %v1621 = vmul.f32 %v1618, %v443
          %v1622 = vadd.f32 %v1615, %v1619
          %v1623 = vadd.f32 %v1616, %v1620
          %v1624 = vadd.f32 %v1617, %v1621
          %v1625 = vstv %s492
          %v1626 = vmul.f32 %v1625, %v438
          %v1627 = vmul.f32 %v1625, %v439
          %v1628 = vmul.f32 %v1625, %v440
          %v1629 = vstv %s541
          %v1630 = vmul.f32 %v1629, %v441
          %v1631 = vmul.f32 %v1629, %v442
          %v1632 = vmul.f32 %v1629, %v443
          %v1633 = vadd.f32 %v1626, %v1630
          %v1634 = vadd.f32 %v1627, %v1631
          %v1635 = vadd.f32 %v1628, %v1632
          %1639 = vrot.lane.b32.xlu0 %v1578, 127
          %v1640 = vpop.permute.xlu0 %1639
          %1641 = vrot.lane.b32.xlu0 %v1579, 127
          %v1642 = vpop.permute.xlu0 %1641
          %1643 = vrot.lane.b32.xlu0 %v1580, 127
          %v1644 = vpop.permute.xlu0 %1643
          %v1648 = vadd.f32 %v1567, %v1640
          %v1649 = vadd.f32 %v1568, %v1642
          %v1650 = vadd.f32 %v1569, %v1644
          %1654 = vrot.lane.b32.xlu0 %v1600, 127
          %v1655 = vpop.permute.xlu0 %1654
          %1656 = vrot.lane.b32.xlu0 %v1601, 127
          %v1657 = vpop.permute.xlu0 %1656
          %1658 = vrot.lane.b32.xlu0 %v1602, 127
          %v1659 = vpop.permute.xlu0 %1658
          %v1663 = vadd.f32 %v1589, %v1655
          %v1664 = vadd.f32 %v1590, %v1657
          %v1665 = vadd.f32 %v1591, %v1659
          %1669 = vrot.lane.b32.xlu0 %v1663, 126
          %v1670 = vpop.permute.xlu0 %1669
          %1671 = vrot.lane.b32.xlu0 %v1664, 126
          %v1672 = vpop.permute.xlu0 %1671
          %1673 = vrot.lane.b32.xlu0 %v1665, 126
          %v1674 = vpop.permute.xlu0 %1673
          %v1678 = vadd.f32 %v1648, %v1670
          %v1679 = vadd.f32 %v1649, %v1672
          %v1680 = vadd.f32 %v1650, %v1674
          %1684 = vrot.lane.b32.xlu0 %v1622, 127
          %v1685 = vpop.permute.xlu0 %1684
          %1686 = vrot.lane.b32.xlu0 %v1623, 127
          %v1687 = vpop.permute.xlu0 %1686
          %1688 = vrot.lane.b32.xlu0 %v1624, 127
          %v1689 = vpop.permute.xlu0 %1688
          %v1693 = vadd.f32 %v1611, %v1685
          %v1694 = vadd.f32 %v1612, %v1687
          %v1695 = vadd.f32 %v1613, %v1689
          %1699 = vrot.lane.b32.xlu0 %v1633, 126
          %v1700 = vpop.permute.xlu0 %1699
          %1701 = vrot.lane.b32.xlu0 %v1634, 126
          %v1702 = vpop.permute.xlu0 %1701
          %1703 = vrot.lane.b32.xlu0 %v1635, 126
          %v1704 = vpop.permute.xlu0 %1703
          %v1708 = vadd.f32 %v1693, %v1700
          %v1709 = vadd.f32 %v1694, %v1702
          %v1710 = vadd.f32 %v1695, %v1704
          %1714 = vrot.lane.b32.xlu0 %v1708, 124
          %v1715 = vpop.permute.xlu0 %1714
          %1716 = vrot.lane.b32.xlu0 %v1709, 124
          %v1717 = vpop.permute.xlu0 %1716
          %1718 = vrot.lane.b32.xlu0 %v1710, 124
          %v1719 = vpop.permute.xlu0 %1718
          %v1723 = vadd.f32 %v1678, %v1715
          %v1724 = vadd.f32 %v1679, %v1717
          %v1725 = vadd.f32 %v1680, %v1719
          %vm1729 = vcmask 1041408
          %v1730 = vrot.slane %v1723, 6
          %v1731 = vrot.slane %v1724, 6
          %v1732 = vsel %vm1729, %v1730, %v1731
          %v1733 = vrot.slane %v1725, 6
          %v1734 = vsel %vm1729, %v1731, %v1733
          %v1737 = vadd.f32 %v1557, %v1732
          %v1738 = vadd.f32 %v1558, %v1734
          %v1739 = vxor.u32 %v1737, 2147483648
          %v1740 = vxor.u32 %v1738, 2147483648
          %v1741 = vmul.f32 %v1739, 1.442695
          %v1742 = vpow.pop %v1741
          %v1743 = vmul.f32 %v1740, 1.442695
          %v1744 = vpow.pop %v1743
          %v1745 = vadd.f32 %v1742, 1.0
          %v1746 = vadd.f32 %v1744, 1.0
          %v1747 = vrcp.pop %v1745
          %v1748 = vmul.f32 1.0, %v1747
          %v1749 = vrcp.pop %v1746
          %v1750 = vmul.f32 1.0, %v1749
          %vm1751 = vcmask 130048
          %1752 = vst.msk [vmem:[%s187] sm:$0xff] %vm1751, %v1748
          %1753 = vst.msk [vmem:[%s187 + $0x8] sm:$0xff] %vm1751, %v1750
        $region44: #{tpu_custom_call.1} parent=27 // pred_fallthru
          _
        %s1754 = sand.u32 %s89, 1
        %s1755 = scalar_lea.sflag [#allocation8], %s1754
        %s1756 = sand.u32 %s89, 1
        %s1757 = smul.addr %s1756, 16
        %s1758 = scalar_lea.vmem [#allocation11], %s1757
        // Predicated region
        $region45: #{tpu_custom_call.1} parent=27 // pred_check
          %p1759 = pneg %p99
        $region46: #{tpu_custom_call.1} parent=27 // pred_check_branch
          %1761 = sbr.rel (%p1759) target = $region48
        $region47: #{tpu_custom_call.1} parent=27 // pred_region
          %s1763 = ssub.s32 256, 256
          %1764 = vsyncadd %s1755, %s1763
          %s1765 = smul.addr %s24, 2
          %s1766 = smul.addr %s1765, 128
          %s1767 = scalar_lea.hbm %s2, %s1766
          %s1768 = sshll.u32 %s1758, 4
          %s1769 = int_to_ptr.vmem [resolvable:$true] %s1768
          %1774 = dma.vmem_to_hbm [thread:$0]  %s1769, 256, %s1767, %s1755, 128, 128, 8
        $region48: #{tpu_custom_call.1} parent=27 // pred_fallthru
          _
      $region28: #{tpu_custom_call.1} parent=5 // pred_fallthru
        _
      %p1775 = scmp.le.s32.totalorder 2, %s15
      // Predicated region
      $region49: #{tpu_custom_call.1} parent=5 // pred_check
        %p1776 = pneg %p1775
      $region50: #{tpu_custom_call.1} parent=5 // pred_check_branch
        %1778 = sbr.rel (%p1776) target = $region52
      $region51: #{tpu_custom_call.1} parent=5 // pred_region
        %s1779 = ssub.s32 %s15, 2
        // Predicated region
        $region53: #{tpu_custom_call.1} parent=51 // pred_check
          %p1780 = pneg %p105
        $region54: #{tpu_custom_call.1} parent=51 // pred_check_branch
          %1782 = sbr.rel (%p1780) target = $region56
        $region55: #{tpu_custom_call.1} parent=51 // pred_region
          %s1783 = sand.u32 %s90, 1
          %s1784 = scalar_lea.sflag [#allocation8], %s1783
          %s1785 = sand.u32 %s90, 1
          %s1786 = smul.addr %s1785, 16
          %s1787 = scalar_lea.vmem [#allocation11], %s1786
          %1788 = dma.done %s1784, 256
        $region56: #{tpu_custom_call.1} parent=51 // pred_fallthru
          _
      $region52: #{tpu_custom_call.1} parent=5 // pred_fallthru
        _
    $region6: #{tpu_custom_call.1} parent=1 // loop_footer
      %s19 = sadd.s32 1, %s15
    $region7: #{tpu_custom_call.1} parent=1 // loop_footer_branch
      %14 = sbr.rel target = $region3
    $region8: #{tpu_custom_call.1} parent=1 // loop_exit
      _
    %1789 = vsyncpa [#allocation7], 1
    %s1790 = scalar_lea.sflag [#allocation7], 1
    %1791 = vsyncpa %s1790, 1
    %1792 = vsyncpa [#allocation8], 1
    %s1793 = scalar_lea.sflag [#allocation8], 1
    %1794 = vsyncpa %s1793, 1
    %1795 = vsyncpa [#allocation9], 1
    %s1796 = scalar_lea.sflag [#allocation9], 1
    %1797 = vsyncpa %s1796, 1

</llo_original>
